<compile_context>
chip_gen: v7x
topology: tpu7x:2x2x1
jax: 0.10.0
libtpu: 0.0.40
codegen_flags: <defaults>
</compile_context>

<pallas_src>
import functools

import jax
import jax.numpy as jnp
from jax.experimental import pallas as pl
from jax.experimental.pallas import tpu as pltpu

INPUT_SIZE = 6
HIDDEN_SIZE = 64
TILE_B_MAX = 1024  # default upper bound on the batch tile (sweepable)


def _round_up(n, m):
    return ((n + m - 1) // m) * m


def narx_mlp_kernel(x_ref, w1t_ref, b1_ref, w2t_ref, b2_ref, w3_ref, b3_ref, o_ref):
    # Natural layout (batch on sublanes):
    #   x:   [TB, F]            (f32, streamed per grid step)
    #   w1t: [F, H]  b1: [1, H] (weights bf16 in fast mode, f32 in exact mode)
    #   w2t: [H, H]  b2: [1, H]
    #   w3:  [1, H]  b3: [1, 1] (layer 3 kept f32 on the VPU/XLU)
    #   o:   [TB, 1]
    x = x_ref[...]                                            # (TB, F) f32

    # Layer 1 on the MXU (K=6 is tiny, but the MXU has huge slack; frees the VALU).
    h1 = jnp.dot(x.astype(w1t_ref.dtype), w1t_ref[...],
                 preferred_element_type=jnp.float32)          # (TB, H) f32 acc
    h1 = jnp.maximum(h1 + b1_ref[...], 0.0)                   # (TB, H)

    # Layer 2 (64x64): the dominant matmul, bf16 operands + f32 accumulation.
    h2 = jnp.dot(h1.astype(w2t_ref.dtype), w2t_ref[...],
                 preferred_element_type=jnp.float32)          # (TB, H)
    h2 = jnp.maximum(h2 + b2_ref[...], 0.0)                   # (TB, H)

    # Layer 3 (N=1): f32 VPU broadcast-multiply + lane reduction -> (TB, 1).
    out = jnp.sum(h2 * w3_ref[...], axis=1, keepdims=True) + b3_ref[...]
    o_ref[...] = out.astype(o_ref.dtype)                      # (TB, 1)


@functools.partial(jax.jit, static_argnames=("tile_b_max", "use_bf16"))
def narx_forward(x, params, *, tile_b_max=TILE_B_MAX, use_bf16=True):
    """x: [B, input_size] float32 -> [B, 1] float32."""
    w1, b1, w2, b2, w3, b3 = params        # torch layouts: (H,F),(H,),(H,H),(H,),(1,H),(1,)
    B, F = x.shape
    H = w1.shape[0]

    # Batch tile: big enough to amortize the ~0.35 us per-grid-step overhead, but
    # bounded by (rounded-up) B so padding waste stays small.  Multiple of 256 keeps
    # the sublane axis aligned and DMAs dense.
    tile_b = max(256, min(_round_up(tile_b_max, 256), _round_up(B, 256)))
    num_tiles = pl.cdiv(B, tile_b)
    Bp = num_tiles * tile_b

    xp = x if Bp == B else jnp.pad(x, ((0, Bp - B), (0, 0)))  # pad only (no transpose)

    # One-time (tiny) weight relayout: transpose for right-multiplication and cast the
    # MXU operands to bf16 in fast mode.  Biases / layer-3 weights stay f32.
    wdt = jnp.bfloat16 if use_bf16 else jnp.float32
    w1t = w1.T.astype(wdt)                 # (F, H)
    w2t = w2.T.astype(wdt)                 # (H, H)
    b1r = b1.reshape(1, H).astype(jnp.float32)
    b2r = b2.reshape(1, H).astype(jnp.float32)
    w3r = w3.reshape(1, H).astype(jnp.float32)
    b3r = b3.reshape(1, 1).astype(jnp.float32)

    wbytes = 2 if use_bf16 else 4
    flops = 2 * Bp * (F * H + H * H + H)
    bytes_accessed = Bp * (F + 1) * 4 + (F * H + H * H) * wbytes + (3 * H + 1) * 4

    out = pl.pallas_call(
        narx_mlp_kernel,
        out_shape=jax.ShapeDtypeStruct((Bp, 1), jnp.float32),
        grid=(num_tiles,),
        in_specs=[
            pl.BlockSpec((tile_b, F), lambda i: (i, 0)),  # x tile (streamed, Buffered(2))
            pl.BlockSpec((F, H), lambda i: (0, 0)),       # weights/biases: constant
            pl.BlockSpec((1, H), lambda i: (0, 0)),       #   index_map => VMEM-resident
            pl.BlockSpec((H, H), lambda i: (0, 0)),       #   across all grid steps
            pl.BlockSpec((1, H), lambda i: (0, 0)),
            pl.BlockSpec((1, H), lambda i: (0, 0)),
            pl.BlockSpec((1, 1), lambda i: (0, 0)),
        ],
        out_specs=pl.BlockSpec((tile_b, 1), lambda i: (i, 0)),
        compiler_params=pltpu.CompilerParams(
            dimension_semantics=("parallel",)),
        cost_estimate=pl.CostEstimate(
            flops=flops, transcendentals=0, bytes_accessed=bytes_accessed),
    )(xp, w1t, b1r, w2t, b2r, w3r, b3r)

    return out[:B]


def init_params(key, input_size=INPUT_SIZE, hidden_size=HIDDEN_SIZE):
    """PyTorch nn.Linear default init (uniform +-1/sqrt(fan_in)), torch layouts."""
    keys = jax.random.split(key, 6)

    def linear(kw, kb, fan_in, w_shape, b_shape):
        bound = 1.0 / jnp.sqrt(jnp.float32(fan_in))
        w = jax.random.uniform(kw, w_shape, jnp.float32, -bound, bound)
        b = jax.random.uniform(kb, b_shape, jnp.float32, -bound, bound)
        return w, b

    w1, b1 = linear(keys[0], keys[1], input_size, (hidden_size, input_size), (hidden_size,))
    w2, b2 = linear(keys[2], keys[3], hidden_size, (hidden_size, hidden_size), (hidden_size,))
    w3, b3 = linear(keys[4], keys[5], hidden_size, (1, hidden_size), (1,))
    return (w1, b1, w2, b2, w3, b3)


def narx_reference(x, params):
    w1, b1, w2, b2, w3, b3 = params
    h1 = jnp.maximum(x @ w1.T + b1, 0.0)
    h2 = jnp.maximum(h1 @ w2.T + b2, 0.0)
    return h2 @ w3.T + b3


if __name__ == "__main__":
    key = jax.random.PRNGKey(0)
    k_params, k_x = jax.random.split(key)

    params = init_params(k_params)
    batch = 600  # exercises batch padding (single 768-wide tile by default)
    x = jax.random.normal(k_x, (batch, INPUT_SIZE), jnp.float32)

    ref = narx_reference(x, params)

    # Exact f32 path (tight tolerance).
    out_f32 = jax.block_until_ready(narx_forward(x, params, use_bf16=False))
    assert out_f32.shape == (batch, 1)
    assert jnp.allclose(out_f32, ref, atol=1e-4, rtol=1e-4), float(
        jnp.max(jnp.abs(out_f32 - ref)))

    # Fast bf16-MXU-operand path (f32 accumulation) vs. the f32 reference.
    out_bf16 = jax.block_until_ready(narx_forward(x, params))
    assert out_bf16.shape == (batch, 1)
    assert jnp.allclose(out_bf16, ref, atol=5e-2, rtol=5e-2), float(
        jnp.max(jnp.abs(out_bf16 - ref)))

    # Multi-tile grid path (forced small tile -> 3 tiles of 256), exact f32.
    out_multi = jax.block_until_ready(
        narx_forward(x, params, tile_b_max=256, use_bf16=False))
    assert jnp.allclose(out_multi, ref, atol=1e-4, rtol=1e-4), float(
        jnp.max(jnp.abs(out_multi - ref)))

    print("KERNEL_OK")
</pallas_src>

<mosaic_0001>
module attributes {stable_mosaic.version = 11 : i64} {
  func.func @narx_mlp_kernel(%arg0: i32, %arg1: memref<768x6xf32, #tpu.memory_space<vmem>>, %arg2: memref<6x64xf32, #tpu.memory_space<vmem>>, %arg3: memref<1x64xf32, #tpu.memory_space<vmem>>, %arg4: memref<64x64xf32, #tpu.memory_space<vmem>>, %arg5: memref<1x64xf32, #tpu.memory_space<vmem>>, %arg6: memref<1x64xf32, #tpu.memory_space<vmem>>, %arg7: memref<1x1xf32, #tpu.memory_space<vmem>>, %arg8: memref<768x1xf32, #tpu.memory_space<vmem>>) attributes {dimension_semantics = [#tpu.dimension_semantics<parallel>], iteration_bounds = array<i64: 1>, scalar_prefetch = 0 : i64, scratch_operands = 0 : i64, tpu.core_type = #tpu.core_type<tc>, window_params = [{transform_indices = @transform_0, window_bounds = array<i64: 768, 6>}, {pipeline_mode = #tpu.pipeline_mode<synchronous>, transform_indices = @transform_1, window_bounds = array<i64: 6, 64>}, {pipeline_mode = #tpu.pipeline_mode<synchronous>, transform_indices = @transform_2, window_bounds = array<i64: 1, 64>}, {pipeline_mode = #tpu.pipeline_mode<synchronous>, transform_indices = @transform_3, window_bounds = array<i64: 64, 64>}, {pipeline_mode = #tpu.pipeline_mode<synchronous>, transform_indices = @transform_4, window_bounds = array<i64: 1, 64>}, {pipeline_mode = #tpu.pipeline_mode<synchronous>, transform_indices = @transform_5, window_bounds = array<i64: 1, 64>}, {pipeline_mode = #tpu.pipeline_mode<synchronous>, transform_indices = @transform_6, window_bounds = array<i64: 1, 1>}, {transform_indices = @transform_7, window_bounds = array<i64: 768, 1>}]} {
    %c0 = arith.constant 0 : index
    %c0_0 = arith.constant 0 : index
    %0 = vector.load %arg1[%c0, %c0_0] : memref<768x6xf32, #tpu.memory_space<vmem>>, vector<768x6xf32>
    %c0_1 = arith.constant 0 : index
    %c0_2 = arith.constant 0 : index
    %1 = vector.load %arg2[%c0_1, %c0_2] : memref<6x64xf32, #tpu.memory_space<vmem>>, vector<6x64xf32>
    %cst = arith.constant dense<0.000000e+00> : vector<768x64xf32>
    %2 = tpu.matmul %0, %1, %cst {dimension_numbers = #tpu.dot_dimension_numbers<[1], [0], [0], [1], [0, 0, 1, 1], [], []>} : vector<768x6xf32>, vector<6x64xf32>, vector<768x64xf32> -> vector<768x64xf32>
    %c0_3 = arith.constant 0 : index
    %c0_4 = arith.constant 0 : index
    %3 = vector.load %arg3[%c0_3, %c0_4] : memref<1x64xf32, #tpu.memory_space<vmem>>, vector<1x64xf32>
    %4 = vector.broadcast %3 : vector<1x64xf32> to vector<768x64xf32>
    %5 = arith.addf %2, %4 : vector<768x64xf32>
    %cst_5 = arith.constant 0.000000e+00 : f32
    %6 = vector.broadcast %cst_5 : f32 to vector<768x64xf32>
    %7 = arith.maximumf %5, %6 : vector<768x64xf32>
    %c0_6 = arith.constant 0 : index
    %c0_7 = arith.constant 0 : index
    %8 = vector.load %arg4[%c0_6, %c0_7] : memref<64x64xf32, #tpu.memory_space<vmem>>, vector<64x64xf32>
    %cst_8 = arith.constant dense<0.000000e+00> : vector<768x64xf32>
    %9 = tpu.matmul %7, %8, %cst_8 {dimension_numbers = #tpu.dot_dimension_numbers<[1], [0], [0], [1], [0, 0, 1, 1], [], []>} : vector<768x64xf32>, vector<64x64xf32>, vector<768x64xf32> -> vector<768x64xf32>
    %c0_9 = arith.constant 0 : index
    %c0_10 = arith.constant 0 : index
    %10 = vector.load %arg5[%c0_9, %c0_10] : memref<1x64xf32, #tpu.memory_space<vmem>>, vector<1x64xf32>
    %11 = vector.broadcast %10 : vector<1x64xf32> to vector<768x64xf32>
    %12 = arith.addf %9, %11 : vector<768x64xf32>
    %cst_11 = arith.constant 0.000000e+00 : f32
    %13 = vector.broadcast %cst_11 : f32 to vector<768x64xf32>
    %14 = arith.maximumf %12, %13 : vector<768x64xf32>
    %c0_12 = arith.constant 0 : index
    %c0_13 = arith.constant 0 : index
    %15 = vector.load %arg6[%c0_12, %c0_13] : memref<1x64xf32, #tpu.memory_space<vmem>>, vector<1x64xf32>
    %16 = vector.broadcast %15 : vector<1x64xf32> to vector<768x64xf32>
    %17 = arith.mulf %14, %16 : vector<768x64xf32>
    %cst_14 = arith.constant dense<0.000000e+00> : vector<768xf32>
    %18 = vector.multi_reduction <add>, %17, %cst_14 [1] : vector<768x64xf32> to vector<768xf32>
    %19 = vector.shape_cast %18 : vector<768xf32> to vector<768x1xf32>
    %c0_15 = arith.constant 0 : index
    %c0_16 = arith.constant 0 : index
    %20 = vector.load %arg7[%c0_15, %c0_16] : memref<1x1xf32, #tpu.memory_space<vmem>>, vector<1x1xf32>
    %21 = vector.broadcast %20 : vector<1x1xf32> to vector<768x1xf32>
    %22 = arith.addf %19, %21 : vector<768x1xf32>
    %c0_17 = arith.constant 0 : index
    %c0_18 = arith.constant 0 : index
    %23 = vector.load %arg8[%c0_17, %c0_18] : memref<768x1xf32, #tpu.memory_space<vmem>>, vector<768x1xf32>
    tpu.vector_store %arg8[%c0_17, %c0_18], %22 {strides = array<i32>} : memref<768x1xf32, #tpu.memory_space<vmem>>, vector<768x1xf32>,
    return
  }
  func.func @transform_0(%arg0: i32) -> (i32, i32) {
    %c0_i32 = arith.constant 0 : i32
    %c0_i32_0 = arith.constant 0 : i32
    return %arg0, %c0_i32 : i32, i32
  }
  func.func @transform_1(%arg0: i32) -> (i32, i32) {
    %c0_i32 = arith.constant 0 : i32
    %c0_i32_0 = arith.constant 0 : i32
    %c0_i32_1 = arith.constant 0 : i32
    return %c0_i32, %c0_i32_0 : i32, i32
  }
  func.func @transform_2(%arg0: i32) -> (i32, i32) {
    %c0_i32 = arith.constant 0 : i32
    %c0_i32_0 = arith.constant 0 : i32
    %c0_i32_1 = arith.constant 0 : i32
    return %c0_i32, %c0_i32_0 : i32, i32
  }
  func.func @transform_3(%arg0: i32) -> (i32, i32) {
    %c0_i32 = arith.constant 0 : i32
    %c0_i32_0 = arith.constant 0 : i32
    %c0_i32_1 = arith.constant 0 : i32
    return %c0_i32, %c0_i32_0 : i32, i32
  }
  func.func @transform_4(%arg0: i32) -> (i32, i32) {
    %c0_i32 = arith.constant 0 : i32
    %c0_i32_0 = arith.constant 0 : i32
    %c0_i32_1 = arith.constant 0 : i32
    return %c0_i32, %c0_i32_0 : i32, i32
  }
  func.func @transform_5(%arg0: i32) -> (i32, i32) {
    %c0_i32 = arith.constant 0 : i32
    %c0_i32_0 = arith.constant 0 : i32
    %c0_i32_1 = arith.constant 0 : i32
    return %c0_i32, %c0_i32_0 : i32, i32
  }
  func.func @transform_6(%arg0: i32) -> (i32, i32) {
    %c0_i32 = arith.constant 0 : i32
    %c0_i32_0 = arith.constant 0 : i32
    %c0_i32_1 = arith.constant 0 : i32
    return %c0_i32, %c0_i32_0 : i32, i32
  }
  func.func @transform_7(%arg0: i32) -> (i32, i32) {
    %c0_i32 = arith.constant 0 : i32
    %c0_i32_0 = arith.constant 0 : i32
    return %arg0, %c0_i32 : i32, i32
  }
}

</mosaic_0001>

<llo_original>
// kernel: narx_forward.1
$region0: #{narx_forward.1}
  #allocation0 [shape = 'u32[]', space=smem, size = 0x4, offset = 0x4, fixed_abs, tag = 'smem constant byte address 0x4 - core index']
  #allocation1 [shape = 'u32[144,128]{1,0:T(1,128)}', space=vmem, size = 0x12000, scoped, tag = 'internal scratch']
  #allocation2 [shape = 'f32[1,1]{1,0:T(1,128)S(1)}', space=vmem, size = 0x200, scoped, tag = 'scoped memory for narx_forward.1']
  %s0 = inlined_call_operand.vmem [shape: f32[768,6], index: 0, kind: input, shape index: {}]
  %s1 = inlined_call_operand.vmem [shape: f32[6,64], index: 1, kind: input, shape index: {}]
  %s2 = inlined_call_operand.vmem [shape: f32[1,64], index: 2, kind: input, shape index: {}]
  %s3 = inlined_call_operand.vmem [shape: f32[64,64], index: 3, kind: input, shape index: {}]
  %s4 = inlined_call_operand.vmem [shape: f32[1,64], index: 4, kind: input, shape index: {}]
  %s5 = inlined_call_operand.vmem [shape: f32[1,64], index: 5, kind: input, shape index: {}]
  %s6 = inlined_call_operand.<no memory space> [shape: f32[1,1], index: 6, kind: input, shape index: {}]
  %s7 = inlined_call_operand.vmem [shape: f32[768,1], index: 7, kind: output, shape index: {}]
  %s8 = sld [smem:[#allocation0]]
  $region38: #{narx_forward.1} parent=0
    _
  %s10 = ssub.s32 1, %s8
  %s11 = scalar_select 0, %s10, %s8
  %v12 = vstv %s6
  %13 = vst [vmem:[#allocation2] sm:$0x1] %v12
  // Predicated region
  $region2: #{narx_forward.1} parent=0 // pred_check
    _
  $region3: #{narx_forward.1} parent=0 // pred_check_branch
    %15 = sbr.rel (0) target = $region5
  $region4: #{narx_forward.1} parent=0 // pred_region
    _
  $region5: #{narx_forward.1} parent=0 // pred_fallthru
    _
  // Predicated region
  $region6: #{narx_forward.1} parent=0 // pred_check
    _
  $region7: #{narx_forward.1} parent=0 // pred_check_branch
    %17 = sbr.rel (0) target = $region9
  $region8: #{narx_forward.1} parent=0 // pred_region
    _
  $region9: #{narx_forward.1} parent=0 // pred_fallthru
    _
  // Predicated region
  $region10: #{narx_forward.1} parent=0 // pred_check
    _
  $region11: #{narx_forward.1} parent=0 // pred_check_branch
    %19 = sbr.rel (0) target = $region13
  $region12: #{narx_forward.1} parent=0 // pred_region
    _
  $region13: #{narx_forward.1} parent=0 // pred_fallthru
    _
  // Predicated region
  $region14: #{narx_forward.1} parent=0 // pred_check
    _
  $region15: #{narx_forward.1} parent=0 // pred_check_branch
    %21 = sbr.rel (0) target = $region17
  $region16: #{narx_forward.1} parent=0 // pred_region
    _
  $region17: #{narx_forward.1} parent=0 // pred_fallthru
    _
  // Predicated region
  $region18: #{narx_forward.1} parent=0 // pred_check
    _
  $region19: #{narx_forward.1} parent=0 // pred_check_branch
    %23 = sbr.rel (0) target = $region21
  $region20: #{narx_forward.1} parent=0 // pred_region
    _
  $region21: #{narx_forward.1} parent=0 // pred_fallthru
    _
  // Predicated region
  $region22: #{narx_forward.1} parent=0 // pred_check
    _
  $region23: #{narx_forward.1} parent=0 // pred_check_branch
    %25 = sbr.rel (0) target = $region25
  $region24: #{narx_forward.1} parent=0 // pred_region
    _
  $region25: #{narx_forward.1} parent=0 // pred_fallthru
    _
  // Predicated region
  $region26: #{narx_forward.1} parent=0 // pred_check
    _
  $region27: #{narx_forward.1} parent=0 // pred_check_branch
    %27 = sbr.rel (0) target = $region29
  $region28: #{narx_forward.1} parent=0 // pred_region
    _
  $region29: #{narx_forward.1} parent=0 // pred_fallthru
    _
  %v28 = vld [vmem:[%s0] sm:$0xff]
  %v29 = vld [vmem:[%s0 + $0x8] sm:$0xff]
  %v30 = vld [vmem:[%s0 + $0x10] sm:$0xff]
  %v31 = vld [vmem:[%s0 + $0x18] sm:$0xff]
  %v32 = vld [vmem:[%s0 + $0x20] sm:$0xff]
  %v33 = vld [vmem:[%s0 + $0x28] sm:$0xff]
  %v34 = vld [vmem:[%s0 + $0x30] sm:$0xff]
  %v35 = vld [vmem:[%s0 + $0x38] sm:$0xff]
  %v36 = vld [vmem:[%s0 + $0x40] sm:$0xff]
  %v37 = vld [vmem:[%s0 + $0x48] sm:$0xff]
  %v38 = vld [vmem:[%s0 + $0x50] sm:$0xff]
  %v39 = vld [vmem:[%s0 + $0x58] sm:$0xff]
  %v40 = vld [vmem:[%s0 + $0x60] sm:$0xff]
  %v41 = vld [vmem:[%s0 + $0x68] sm:$0xff]
  %v42 = vld [vmem:[%s0 + $0x70] sm:$0xff]
  %v43 = vld [vmem:[%s0 + $0x78] sm:$0xff]
  %v44 = vld [vmem:[%s0 + $0x80] sm:$0xff]
  %v45 = vld [vmem:[%s0 + $0x88] sm:$0xff]
  %v46 = vld [vmem:[%s0 + $0x90] sm:$0xff]
  %v47 = vld [vmem:[%s0 + $0x98] sm:$0xff]
  %v48 = vld [vmem:[%s0 + $0xa0] sm:$0xff]
  %v49 = vld [vmem:[%s0 + $0xa8] sm:$0xff]
  %v50 = vld [vmem:[%s0 + $0xb0] sm:$0xff]
  %v51 = vld [vmem:[%s0 + $0xb8] sm:$0xff]
  %v52 = vld [vmem:[%s0 + $0xc0] sm:$0xff]
  %v53 = vld [vmem:[%s0 + $0xc8] sm:$0xff]
  %v54 = vld [vmem:[%s0 + $0xd0] sm:$0xff]
  %v55 = vld [vmem:[%s0 + $0xd8] sm:$0xff]
  %v56 = vld [vmem:[%s0 + $0xe0] sm:$0xff]
  %v57 = vld [vmem:[%s0 + $0xe8] sm:$0xff]
  %v58 = vld [vmem:[%s0 + $0xf0] sm:$0xff]
  %v59 = vld [vmem:[%s0 + $0xf8] sm:$0xff]
  %v60 = vld [vmem:[%s0 + $0x100] sm:$0xff]
  %v61 = vld [vmem:[%s0 + $0x108] sm:$0xff]
  %v62 = vld [vmem:[%s0 + $0x110] sm:$0xff]
  %v63 = vld [vmem:[%s0 + $0x118] sm:$0xff]
  %v64 = vld [vmem:[%s0 + $0x120] sm:$0xff]
  %v65 = vld [vmem:[%s0 + $0x128] sm:$0xff]
  %v66 = vld [vmem:[%s0 + $0x130] sm:$0xff]
  %v67 = vld [vmem:[%s0 + $0x138] sm:$0xff]
  %v68 = vld [vmem:[%s0 + $0x140] sm:$0xff]
  %v69 = vld [vmem:[%s0 + $0x148] sm:$0xff]
  %v70 = vld [vmem:[%s0 + $0x150] sm:$0xff]
  %v71 = vld [vmem:[%s0 + $0x158] sm:$0xff]
  %v72 = vld [vmem:[%s0 + $0x160] sm:$0xff]
  %v73 = vld [vmem:[%s0 + $0x168] sm:$0xff]
  %v74 = vld [vmem:[%s0 + $0x170] sm:$0xff]
  %v75 = vld [vmem:[%s0 + $0x178] sm:$0xff]
  %v76 = vld [vmem:[%s0 + $0x180] sm:$0xff]
  %v77 = vld [vmem:[%s0 + $0x188] sm:$0xff]
  %v78 = vld [vmem:[%s0 + $0x190] sm:$0xff]
  %v79 = vld [vmem:[%s0 + $0x198] sm:$0xff]
  %v80 = vld [vmem:[%s0 + $0x1a0] sm:$0xff]
  %v81 = vld [vmem:[%s0 + $0x1a8] sm:$0xff]
  %v82 = vld [vmem:[%s0 + $0x1b0] sm:$0xff]
  %v83 = vld [vmem:[%s0 + $0x1b8] sm:$0xff]
  %v84 = vld [vmem:[%s0 + $0x1c0] sm:$0xff]
  %v85 = vld [vmem:[%s0 + $0x1c8] sm:$0xff]
  %v86 = vld [vmem:[%s0 + $0x1d0] sm:$0xff]
  %v87 = vld [vmem:[%s0 + $0x1d8] sm:$0xff]
  %v88 = vld [vmem:[%s0 + $0x1e0] sm:$0xff]
  %v89 = vld [vmem:[%s0 + $0x1e8] sm:$0xff]
  %v90 = vld [vmem:[%s0 + $0x1f0] sm:$0xff]
  %v91 = vld [vmem:[%s0 + $0x1f8] sm:$0xff]
  %v92 = vld [vmem:[%s0 + $0x200] sm:$0xff]
  %v93 = vld [vmem:[%s0 + $0x208] sm:$0xff]
  %v94 = vld [vmem:[%s0 + $0x210] sm:$0xff]
  %v95 = vld [vmem:[%s0 + $0x218] sm:$0xff]
  %v96 = vld [vmem:[%s0 + $0x220] sm:$0xff]
  %v97 = vld [vmem:[%s0 + $0x228] sm:$0xff]
  %v98 = vld [vmem:[%s0 + $0x230] sm:$0xff]
  %v99 = vld [vmem:[%s0 + $0x238] sm:$0xff]
  %v100 = vld [vmem:[%s0 + $0x240] sm:$0xff]
  %v101 = vld [vmem:[%s0 + $0x248] sm:$0xff]
  %v102 = vld [vmem:[%s0 + $0x250] sm:$0xff]
  %v103 = vld [vmem:[%s0 + $0x258] sm:$0xff]
  %v104 = vld [vmem:[%s0 + $0x260] sm:$0xff]
  %v105 = vld [vmem:[%s0 + $0x268] sm:$0xff]
  %v106 = vld [vmem:[%s0 + $0x270] sm:$0xff]
  %v107 = vld [vmem:[%s0 + $0x278] sm:$0xff]
  %v108 = vld [vmem:[%s0 + $0x280] sm:$0xff]
  %v109 = vld [vmem:[%s0 + $0x288] sm:$0xff]
  %v110 = vld [vmem:[%s0 + $0x290] sm:$0xff]
  %v111 = vld [vmem:[%s0 + $0x298] sm:$0xff]
  %v112 = vld [vmem:[%s0 + $0x2a0] sm:$0xff]
  %v113 = vld [vmem:[%s0 + $0x2a8] sm:$0xff]
  %v114 = vld [vmem:[%s0 + $0x2b0] sm:$0xff]
  %v115 = vld [vmem:[%s0 + $0x2b8] sm:$0xff]
  %v116 = vld [vmem:[%s0 + $0x2c0] sm:$0xff]
  %v117 = vld [vmem:[%s0 + $0x2c8] sm:$0xff]
  %v118 = vld [vmem:[%s0 + $0x2d0] sm:$0xff]
  %v119 = vld [vmem:[%s0 + $0x2d8] sm:$0xff]
  %v120 = vld [vmem:[%s0 + $0x2e0] sm:$0xff]
  %v121 = vld [vmem:[%s0 + $0x2e8] sm:$0xff]
  %v122 = vld [vmem:[%s0 + $0x2f0] sm:$0xff]
  %v123 = vld [vmem:[%s0 + $0x2f8] sm:$0xff]
  %v124 = vld [vmem:[%s1] sm:$0x3f]
  %v125 = vld [vmem:[%s2] sm:$0x1]
  %v127 = vlaneseq
  %v128 = vshrl.u32 %v127, 7
  %v129 = vsub.s32 0, %v128
  %v130 = vrot.slane %v125, %v129
  %vm132 = vcmask 48128
  %v134 = vsel %vm132, %v28, 0
  %v137 = vsel %vm132, %v29, 0
  %v140 = vsel %vm132, %v30, 0
  %v143 = vsel %vm132, %v31, 0
  %v146 = vsel %vm132, %v32, 0
  %v149 = vsel %vm132, %v33, 0
  %v152 = vsel %vm132, %v34, 0
  %v155 = vsel %vm132, %v35, 0
  %v158 = vsel %vm132, %v36, 0
  %v161 = vsel %vm132, %v37, 0
  %v164 = vsel %vm132, %v38, 0
  %v167 = vsel %vm132, %v39, 0
  %v170 = vsel %vm132, %v40, 0
  %v173 = vsel %vm132, %v41, 0
  %v176 = vsel %vm132, %v42, 0
  %v179 = vsel %vm132, %v43, 0
  %v182 = vsel %vm132, %v44, 0
  %v185 = vsel %vm132, %v45, 0
  %v188 = vsel %vm132, %v46, 0
  %v191 = vsel %vm132, %v47, 0
  %v194 = vsel %vm132, %v48, 0
  %v197 = vsel %vm132, %v49, 0
  %v200 = vsel %vm132, %v50, 0
  %v203 = vsel %vm132, %v51, 0
  %v206 = vsel %vm132, %v52, 0
  %v209 = vsel %vm132, %v53, 0
  %v212 = vsel %vm132, %v54, 0
  %v215 = vsel %vm132, %v55, 0
  %v218 = vsel %vm132, %v56, 0
  %v221 = vsel %vm132, %v57, 0
  %v224 = vsel %vm132, %v58, 0
  %v227 = vsel %vm132, %v59, 0
  %v230 = vsel %vm132, %v60, 0
  %v233 = vsel %vm132, %v61, 0
  %v236 = vsel %vm132, %v62, 0
  %v239 = vsel %vm132, %v63, 0
  %v242 = vsel %vm132, %v64, 0
  %v245 = vsel %vm132, %v65, 0
  %v248 = vsel %vm132, %v66, 0
  %v251 = vsel %vm132, %v67, 0
  %v254 = vsel %vm132, %v68, 0
  %v257 = vsel %vm132, %v69, 0
  %v260 = vsel %vm132, %v70, 0
  %v263 = vsel %vm132, %v71, 0
  %v266 = vsel %vm132, %v72, 0
  %v269 = vsel %vm132, %v73, 0
  %v272 = vsel %vm132, %v74, 0
  %v275 = vsel %vm132, %v75, 0
  %v278 = vsel %vm132, %v76, 0
  %v281 = vsel %vm132, %v77, 0
  %v284 = vsel %vm132, %v78, 0
  %v287 = vsel %vm132, %v79, 0
  %v290 = vsel %vm132, %v80, 0
  %v293 = vsel %vm132, %v81, 0
  %v296 = vsel %vm132, %v82, 0
  %v299 = vsel %vm132, %v83, 0
  %v302 = vsel %vm132, %v84, 0
  %v305 = vsel %vm132, %v85, 0
  %v308 = vsel %vm132, %v86, 0
  %v311 = vsel %vm132, %v87, 0
  %v314 = vsel %vm132, %v88, 0
  %v317 = vsel %vm132, %v89, 0
  %v320 = vsel %vm132, %v90, 0
  %v323 = vsel %vm132, %v91, 0
  %v326 = vsel %vm132, %v92, 0
  %v329 = vsel %vm132, %v93, 0
  %v332 = vsel %vm132, %v94, 0
  %v335 = vsel %vm132, %v95, 0
  %v338 = vsel %vm132, %v96, 0
  %v341 = vsel %vm132, %v97, 0
  %v344 = vsel %vm132, %v98, 0
  %v347 = vsel %vm132, %v99, 0
  %v350 = vsel %vm132, %v100, 0
  %v353 = vsel %vm132, %v101, 0
  %v356 = vsel %vm132, %v102, 0
  %v359 = vsel %vm132, %v103, 0
  %v362 = vsel %vm132, %v104, 0
  %v365 = vsel %vm132, %v105, 0
  %v368 = vsel %vm132, %v106, 0
  %v371 = vsel %vm132, %v107, 0
  %v374 = vsel %vm132, %v108, 0
  %v377 = vsel %vm132, %v109, 0
  %v380 = vsel %vm132, %v110, 0
  %v383 = vsel %vm132, %v111, 0
  %v386 = vsel %vm132, %v112, 0
  %v389 = vsel %vm132, %v113, 0
  %v392 = vsel %vm132, %v114, 0
  %v395 = vsel %vm132, %v115, 0
  %v398 = vsel %vm132, %v116, 0
  %v401 = vsel %vm132, %v117, 0
  %v404 = vsel %vm132, %v118, 0
  %v407 = vsel %vm132, %v119, 0
  %v410 = vsel %vm132, %v120, 0
  %v413 = vsel %vm132, %v121, 0
  %v416 = vsel %vm132, %v122, 0
  %v419 = vsel %vm132, %v123, 0
  %vm421 = vcmask 1045504
  %v423 = vsel %vm421, %v124, 0
  %425 = vmatprep.subr.mxu0 0.0
  %426 = vmatpush1.msra.mxu0 %v423
  %427 = vmatprep.subr.mxu0 0.0
  %428 = vmatpush1.msra.mxu0 0.0
  %429 = vmatprep.subr.mxu0 0.0
  %430 = vmatpush1.msra.mxu0 0.0
  %431 = vmatprep.subr.mxu0 0.0
  %432 = vmatpush1.msra.mxu0 0.0
  %433 = vmatprep.subr.mxu0 0.0
  %434 = vmatpush1.msra.mxu0 0.0
  %435 = vmatprep.subr.mxu0 0.0
  %436 = vmatpush1.msra.mxu0 0.0
  %437 = vmatprep.subr.mxu0 0.0
  %438 = vmatpush1.msra.mxu0 0.0
  %439 = vmatprep.subr.mxu0 0.0
  %440 = vmatpush1.msra.mxu0 0.0
  %441 = vmatprep.subr.mxu0 0.0
  %442 = vmatpush1.msra.mxu0 0.0
  %443 = vmatprep.subr.mxu0 0.0
  %444 = vmatpush1.msra.mxu0 0.0
  %445 = vmatprep.subr.mxu0 0.0
  %446 = vmatpush1.msra.mxu0 0.0
  %447 = vmatprep.subr.mxu0 0.0
  %448 = vmatpush1.msra.mxu0 0.0
  %449 = vmatprep.subr.mxu0 0.0
  %450 = vmatpush1.msra.mxu0 0.0
  %451 = vmatprep.subr.mxu0 0.0
  %452 = vmatpush1.msra.mxu0 0.0
  %453 = vmatprep.subr.mxu0 0.0
  %454 = vmatpush1.msra.mxu0 0.0
  %455 = vmatprep.subr.mxu0 0.0
  %456 = vmatpush1.msra.mxu0 0.0
  %457 = vmatprep.subr.mxu0 0.0
  %458 = vmatpush1.msra.mxu0 0.0
  %459 = vmatprep.subr.mxu0 0.0
  %460 = vmatpush1.msra.mxu0 0.0
  %461 = vmatprep.subr.mxu0 0.0
  %462 = vmatpush1.msra.mxu0 0.0
  %463 = vmatprep.subr.mxu0 0.0
  %464 = vmatpush1.msra.mxu0 0.0
  %465 = vmatprep.subr.mxu0 0.0
  %466 = vmatpush1.msra.mxu0 0.0
  %467 = vmatprep.subr.mxu0 0.0
  %468 = vmatpush1.msra.mxu0 0.0
  %469 = vmatprep.subr.mxu0 0.0
  %470 = vmatpush1.msra.mxu0 0.0
  %471 = vmatprep.subr.mxu0 0.0
  %472 = vmatpush1.msra.mxu0 0.0
  %473 = vmatprep.subr.mxu0 0.0
  %474 = vmatpush1.msra.mxu0 0.0
  %475 = vmatprep.subr.mxu0 0.0
  %476 = vmatpush1.msra.mxu0 0.0
  %477 = vmatprep.subr.mxu0 0.0
  %478 = vmatpush1.msra.mxu0 0.0
  %479 = vmatprep.subr.mxu0 0.0
  %480 = vmatpush1.msra.mxu0 0.0
  %481 = vmatprep.subr.mxu0 0.0
  %482 = vmatpush1.msra.mxu0 0.0
  %483 = vmatprep.subr.mxu0 0.0
  %484 = vmatpush1.msra.mxu0 0.0
  %485 = vmatprep.subr.mxu0 0.0
  %486 = vmatpush1.msra.mxu0 0.0
  %487 = vmatprep.subr.mxu0 0.0
  %488 = vmatpush1.msra.mxu0 0.0
  %489 = vmatprep.mubr.f32.mxu0 0.0
  %490 = vmatmul.mubr.f32.gmra.mrb[0].mxu0 %v134
  %v491 = vpop.f32.mrb[0].mxu0
  %v492 = vadd.f32 %v130, %v491
  %v493 = vpop.f32.mrb[0].mxu0
  %494 = vmatprep.mubr.f32.mxu0 0.0
  %495 = vmatmul.mubr.f32.gmra.mrb[0].mxu0 %v137
  %v496 = vpop.f32.mrb[0].mxu0
  %v497 = vadd.f32 %v130, %v496
  %v498 = vpop.f32.mrb[0].mxu0
  %499 = vmatprep.mubr.f32.mxu0 0.0
  %500 = vmatmul.mubr.f32.gmra.mrb[0].mxu0 %v140
  %v501 = vpop.f32.mrb[0].mxu0
  %v502 = vadd.f32 %v130, %v501
  %v503 = vpop.f32.mrb[0].mxu0
  %504 = vmatprep.mubr.f32.mxu0 0.0
  %505 = vmatmul.mubr.f32.gmra.mrb[0].mxu0 %v143
  %v506 = vpop.f32.mrb[0].mxu0
  %v507 = vadd.f32 %v130, %v506
  %v508 = vpop.f32.mrb[0].mxu0
  %509 = vmatprep.mubr.f32.mxu0 0.0
  %510 = vmatmul.mubr.f32.gmra.mrb[0].mxu0 %v146
  %v511 = vpop.f32.mrb[0].mxu0
  %v512 = vadd.f32 %v130, %v511
  %v513 = vpop.f32.mrb[0].mxu0
  %514 = vmatprep.mubr.f32.mxu0 0.0
  %515 = vmatmul.mubr.f32.gmra.mrb[0].mxu0 %v149
  %v516 = vpop.f32.mrb[0].mxu0
  %v517 = vadd.f32 %v130, %v516
  %v518 = vpop.f32.mrb[0].mxu0
  %519 = vmatprep.mubr.f32.mxu0 0.0
  %520 = vmatmul.mubr.f32.gmra.mrb[0].mxu0 %v152
  %v521 = vpop.f32.mrb[0].mxu0
  %v522 = vadd.f32 %v130, %v521
  %v523 = vpop.f32.mrb[0].mxu0
  %524 = vmatprep.mubr.f32.mxu0 0.0
  %525 = vmatmul.mubr.f32.gmra.mrb[0].mxu0 %v155
  %v526 = vpop.f32.mrb[0].mxu0
  %v527 = vadd.f32 %v130, %v526
  %v528 = vpop.f32.mrb[0].mxu0
  %529 = vmatprep.mubr.f32.mxu0 0.0
  %530 = vmatmul.mubr.f32.gmra.mrb[0].mxu0 %v158
  %v531 = vpop.f32.mrb[0].mxu0
  %v532 = vadd.f32 %v130, %v531
  %v533 = vpop.f32.mrb[0].mxu0
  %534 = vmatprep.mubr.f32.mxu0 0.0
  %535 = vmatmul.mubr.f32.gmra.mrb[0].mxu0 %v161
  %v536 = vpop.f32.mrb[0].mxu0
  %v537 = vadd.f32 %v130, %v536
  %v538 = vpop.f32.mrb[0].mxu0
  %539 = vmatprep.mubr.f32.mxu0 0.0
  %540 = vmatmul.mubr.f32.gmra.mrb[0].mxu0 %v164
  %v541 = vpop.f32.mrb[0].mxu0
  %v542 = vadd.f32 %v130, %v541
  %v543 = vpop.f32.mrb[0].mxu0
  %544 = vmatprep.mubr.f32.mxu0 0.0
  %545 = vmatmul.mubr.f32.gmra.mrb[0].mxu0 %v167
  %v546 = vpop.f32.mrb[0].mxu0
  %v547 = vadd.f32 %v130, %v546
  %v548 = vpop.f32.mrb[0].mxu0
  %549 = vmatprep.mubr.f32.mxu0 0.0
  %550 = vmatmul.mubr.f32.gmra.mrb[0].mxu0 %v170
  %v551 = vpop.f32.mrb[0].mxu0
  %v552 = vadd.f32 %v130, %v551
  %v553 = vpop.f32.mrb[0].mxu0
  %554 = vmatprep.mubr.f32.mxu0 0.0
  %555 = vmatmul.mubr.f32.gmra.mrb[0].mxu0 %v173
  %v556 = vpop.f32.mrb[0].mxu0
  %v557 = vadd.f32 %v130, %v556
  %v558 = vpop.f32.mrb[0].mxu0
  %559 = vmatprep.mubr.f32.mxu0 0.0
  %560 = vmatmul.mubr.f32.gmra.mrb[0].mxu0 %v176
  %v561 = vpop.f32.mrb[0].mxu0
  %v562 = vadd.f32 %v130, %v561
  %v563 = vpop.f32.mrb[0].mxu0
  %564 = vmatprep.mubr.f32.mxu0 0.0
  %565 = vmatmul.mubr.f32.gmra.mrb[0].mxu0 %v179
  %v566 = vpop.f32.mrb[0].mxu0
  %v567 = vadd.f32 %v130, %v566
  %v568 = vpop.f32.mrb[0].mxu0
  %569 = vmatprep.mubr.f32.mxu0 0.0
  %570 = vmatmul.mubr.f32.gmra.mrb[0].mxu0 %v182
  %v571 = vpop.f32.mrb[0].mxu0
  %v572 = vadd.f32 %v130, %v571
  %v573 = vpop.f32.mrb[0].mxu0
  %574 = vmatprep.mubr.f32.mxu0 0.0
  %575 = vmatmul.mubr.f32.gmra.mrb[0].mxu0 %v185
  %v576 = vpop.f32.mrb[0].mxu0
  %v577 = vadd.f32 %v130, %v576
  %v578 = vpop.f32.mrb[0].mxu0
  %579 = vmatprep.mubr.f32.mxu0 0.0
  %580 = vmatmul.mubr.f32.gmra.mrb[0].mxu0 %v188
  %v581 = vpop.f32.mrb[0].mxu0
  %v582 = vadd.f32 %v130, %v581
  %v583 = vpop.f32.mrb[0].mxu0
  %584 = vmatprep.mubr.f32.mxu0 0.0
  %585 = vmatmul.mubr.f32.gmra.mrb[0].mxu0 %v191
  %v586 = vpop.f32.mrb[0].mxu0
  %v587 = vadd.f32 %v130, %v586
  %v588 = vpop.f32.mrb[0].mxu0
  %589 = vmatprep.mubr.f32.mxu0 0.0
  %590 = vmatmul.mubr.f32.gmra.mrb[0].mxu0 %v194
  %v591 = vpop.f32.mrb[0].mxu0
  %v592 = vadd.f32 %v130, %v591
  %v593 = vpop.f32.mrb[0].mxu0
  %594 = vmatprep.mubr.f32.mxu0 0.0
  %595 = vmatmul.mubr.f32.gmra.mrb[0].mxu0 %v197
  %v596 = vpop.f32.mrb[0].mxu0
  %v597 = vadd.f32 %v130, %v596
  %v598 = vpop.f32.mrb[0].mxu0
  %599 = vmatprep.mubr.f32.mxu0 0.0
  %600 = vmatmul.mubr.f32.gmra.mrb[0].mxu0 %v200
  %v601 = vpop.f32.mrb[0].mxu0
  %v602 = vadd.f32 %v130, %v601
  %v603 = vpop.f32.mrb[0].mxu0
  %604 = vmatprep.mubr.f32.mxu0 0.0
  %605 = vmatmul.mubr.f32.gmra.mrb[0].mxu0 %v203
  %v606 = vpop.f32.mrb[0].mxu0
  %v607 = vadd.f32 %v130, %v606
  %v608 = vpop.f32.mrb[0].mxu0
  %609 = vmatprep.mubr.f32.mxu0 0.0
  %610 = vmatmul.mubr.f32.gmra.mrb[0].mxu0 %v206
  %v611 = vpop.f32.mrb[0].mxu0
  %v612 = vadd.f32 %v130, %v611
  %v613 = vpop.f32.mrb[0].mxu0
  %614 = vmatprep.mubr.f32.mxu0 0.0
  %615 = vmatmul.mubr.f32.gmra.mrb[0].mxu0 %v209
  %v616 = vpop.f32.mrb[0].mxu0
  %v617 = vadd.f32 %v130, %v616
  %v618 = vpop.f32.mrb[0].mxu0
  %619 = vmatprep.mubr.f32.mxu0 0.0
  %620 = vmatmul.mubr.f32.gmra.mrb[0].mxu0 %v212
  %v621 = vpop.f32.mrb[0].mxu0
  %v622 = vadd.f32 %v130, %v621
  %v623 = vpop.f32.mrb[0].mxu0
  %624 = vmatprep.mubr.f32.mxu0 0.0
  %625 = vmatmul.mubr.f32.gmra.mrb[0].mxu0 %v215
  %v626 = vpop.f32.mrb[0].mxu0
  %v627 = vadd.f32 %v130, %v626
  %v628 = vpop.f32.mrb[0].mxu0
  %629 = vmatprep.mubr.f32.mxu0 0.0
  %630 = vmatmul.mubr.f32.gmra.mrb[0].mxu0 %v218
  %v631 = vpop.f32.mrb[0].mxu0
  %v632 = vadd.f32 %v130, %v631
  %v633 = vpop.f32.mrb[0].mxu0
  %634 = vmatprep.mubr.f32.mxu0 0.0
  %635 = vmatmul.mubr.f32.gmra.mrb[0].mxu0 %v221
  %v636 = vpop.f32.mrb[0].mxu0
  %v637 = vadd.f32 %v130, %v636
  %v638 = vpop.f32.mrb[0].mxu0
  %639 = vmatprep.mubr.f32.mxu0 0.0
  %640 = vmatmul.mubr.f32.gmra.mrb[0].mxu0 %v224
  %v641 = vpop.f32.mrb[0].mxu0
  %v642 = vadd.f32 %v130, %v641
  %v643 = vpop.f32.mrb[0].mxu0
  %644 = vmatprep.mubr.f32.mxu0 0.0
  %645 = vmatmul.mubr.f32.gmra.mrb[0].mxu0 %v227
  %v646 = vpop.f32.mrb[0].mxu0
  %v647 = vadd.f32 %v130, %v646
  %v648 = vpop.f32.mrb[0].mxu0
  %649 = vmatprep.mubr.f32.mxu0 0.0
  %650 = vmatmul.mubr.f32.gmra.mrb[0].mxu0 %v230
  %v651 = vpop.f32.mrb[0].mxu0
  %v652 = vadd.f32 %v130, %v651
  %v653 = vpop.f32.mrb[0].mxu0
  %654 = vmatprep.mubr.f32.mxu0 0.0
  %655 = vmatmul.mubr.f32.gmra.mrb[0].mxu0 %v233
  %v656 = vpop.f32.mrb[0].mxu0
  %v657 = vadd.f32 %v130, %v656
  %v658 = vpop.f32.mrb[0].mxu0
  %659 = vmatprep.mubr.f32.mxu0 0.0
  %660 = vmatmul.mubr.f32.gmra.mrb[0].mxu0 %v236
  %v661 = vpop.f32.mrb[0].mxu0
  %v662 = vadd.f32 %v130, %v661
  %v663 = vpop.f32.mrb[0].mxu0
  %664 = vmatprep.mubr.f32.mxu0 0.0
  %665 = vmatmul.mubr.f32.gmra.mrb[0].mxu0 %v239
  %v666 = vpop.f32.mrb[0].mxu0
  %v667 = vadd.f32 %v130, %v666
  %v668 = vpop.f32.mrb[0].mxu0
  %669 = vmatprep.mubr.f32.mxu0 0.0
  %670 = vmatmul.mubr.f32.gmra.mrb[0].mxu0 %v242
  %v671 = vpop.f32.mrb[0].mxu0
  %v672 = vadd.f32 %v130, %v671
  %v673 = vpop.f32.mrb[0].mxu0
  %674 = vmatprep.mubr.f32.mxu0 0.0
  %675 = vmatmul.mubr.f32.gmra.mrb[0].mxu0 %v245
  %v676 = vpop.f32.mrb[0].mxu0
  %v677 = vadd.f32 %v130, %v676
  %v678 = vpop.f32.mrb[0].mxu0
  %679 = vmatprep.mubr.f32.mxu0 0.0
  %680 = vmatmul.mubr.f32.gmra.mrb[0].mxu0 %v248
  %v681 = vpop.f32.mrb[0].mxu0
  %v682 = vadd.f32 %v130, %v681
  %v683 = vpop.f32.mrb[0].mxu0
  %684 = vmatprep.mubr.f32.mxu0 0.0
  %685 = vmatmul.mubr.f32.gmra.mrb[0].mxu0 %v251
  %v686 = vpop.f32.mrb[0].mxu0
  %v687 = vadd.f32 %v130, %v686
  %v688 = vpop.f32.mrb[0].mxu0
  %689 = vmatprep.mubr.f32.mxu0 0.0
  %690 = vmatmul.mubr.f32.gmra.mrb[0].mxu0 %v254
  %v691 = vpop.f32.mrb[0].mxu0
  %v692 = vadd.f32 %v130, %v691
  %v693 = vpop.f32.mrb[0].mxu0
  %694 = vmatprep.mubr.f32.mxu0 0.0
  %695 = vmatmul.mubr.f32.gmra.mrb[0].mxu0 %v257
  %v696 = vpop.f32.mrb[0].mxu0
  %v697 = vadd.f32 %v130, %v696
  %v698 = vpop.f32.mrb[0].mxu0
  %699 = vmatprep.mubr.f32.mxu0 0.0
  %700 = vmatmul.mubr.f32.gmra.mrb[0].mxu0 %v260
  %v701 = vpop.f32.mrb[0].mxu0
  %v702 = vadd.f32 %v130, %v701
  %v703 = vpop.f32.mrb[0].mxu0
  %704 = vmatprep.mubr.f32.mxu0 0.0
  %705 = vmatmul.mubr.f32.gmra.mrb[0].mxu0 %v263
  %v706 = vpop.f32.mrb[0].mxu0
  %v707 = vadd.f32 %v130, %v706
  %v708 = vpop.f32.mrb[0].mxu0
  %709 = vmatprep.mubr.f32.mxu0 0.0
  %710 = vmatmul.mubr.f32.gmra.mrb[0].mxu0 %v266
  %v711 = vpop.f32.mrb[0].mxu0
  %v712 = vadd.f32 %v130, %v711
  %v713 = vpop.f32.mrb[0].mxu0
  %714 = vmatprep.mubr.f32.mxu0 0.0
  %715 = vmatmul.mubr.f32.gmra.mrb[0].mxu0 %v269
  %v716 = vpop.f32.mrb[0].mxu0
  %v717 = vadd.f32 %v130, %v716
  %v718 = vpop.f32.mrb[0].mxu0
  %719 = vmatprep.mubr.f32.mxu0 0.0
  %720 = vmatmul.mubr.f32.gmra.mrb[0].mxu0 %v272
  %v721 = vpop.f32.mrb[0].mxu0
  %v722 = vadd.f32 %v130, %v721
  %v723 = vpop.f32.mrb[0].mxu0
  %724 = vmatprep.mubr.f32.mxu0 0.0
  %725 = vmatmul.mubr.f32.gmra.mrb[0].mxu0 %v275
  %v726 = vpop.f32.mrb[0].mxu0
  %v727 = vadd.f32 %v130, %v726
  %v728 = vpop.f32.mrb[0].mxu0
  %729 = vmatprep.mubr.f32.mxu0 0.0
  %730 = vmatmul.mubr.f32.gmra.mrb[0].mxu0 %v278
  %v731 = vpop.f32.mrb[0].mxu0
  %v732 = vadd.f32 %v130, %v731
  %v733 = vpop.f32.mrb[0].mxu0
  %734 = vmatprep.mubr.f32.mxu0 0.0
  %735 = vmatmul.mubr.f32.gmra.mrb[0].mxu0 %v281
  %v736 = vpop.f32.mrb[0].mxu0
  %v737 = vadd.f32 %v130, %v736
  %v738 = vpop.f32.mrb[0].mxu0
  %739 = vmatprep.mubr.f32.mxu0 0.0
  %740 = vmatmul.mubr.f32.gmra.mrb[0].mxu0 %v284
  %v741 = vpop.f32.mrb[0].mxu0
  %v742 = vadd.f32 %v130, %v741
  %v743 = vpop.f32.mrb[0].mxu0
  %744 = vmatprep.mubr.f32.mxu0 0.0
  %745 = vmatmul.mubr.f32.gmra.mrb[0].mxu0 %v287
  %v746 = vpop.f32.mrb[0].mxu0
  %v747 = vadd.f32 %v130, %v746
  %v748 = vpop.f32.mrb[0].mxu0
  %749 = vmatprep.mubr.f32.mxu0 0.0
  %750 = vmatmul.mubr.f32.gmra.mrb[0].mxu0 %v290
  %v751 = vpop.f32.mrb[0].mxu0
  %v752 = vadd.f32 %v130, %v751
  %v753 = vpop.f32.mrb[0].mxu0
  %754 = vmatprep.mubr.f32.mxu0 0.0
  %755 = vmatmul.mubr.f32.gmra.mrb[0].mxu0 %v293
  %v756 = vpop.f32.mrb[0].mxu0
  %v757 = vadd.f32 %v130, %v756
  %v758 = vpop.f32.mrb[0].mxu0
  %759 = vmatprep.mubr.f32.mxu0 0.0
  %760 = vmatmul.mubr.f32.gmra.mrb[0].mxu0 %v296
  %v761 = vpop.f32.mrb[0].mxu0
  %v762 = vadd.f32 %v130, %v761
  %v763 = vpop.f32.mrb[0].mxu0
  %764 = vmatprep.mubr.f32.mxu0 0.0
  %765 = vmatmul.mubr.f32.gmra.mrb[0].mxu0 %v299
  %v766 = vpop.f32.mrb[0].mxu0
  %v767 = vadd.f32 %v130, %v766
  %v768 = vpop.f32.mrb[0].mxu0
  %769 = vmatprep.mubr.f32.mxu0 0.0
  %770 = vmatmul.mubr.f32.gmra.mrb[0].mxu0 %v302
  %v771 = vpop.f32.mrb[0].mxu0
  %v772 = vadd.f32 %v130, %v771
  %v773 = vpop.f32.mrb[0].mxu0
  %774 = vmatprep.mubr.f32.mxu0 0.0
  %775 = vmatmul.mubr.f32.gmra.mrb[0].mxu0 %v305
  %v776 = vpop.f32.mrb[0].mxu0
  %v777 = vadd.f32 %v130, %v776
  %v778 = vpop.f32.mrb[0].mxu0
  %779 = vmatprep.mubr.f32.mxu0 0.0
  %780 = vmatmul.mubr.f32.gmra.mrb[0].mxu0 %v308
  %v781 = vpop.f32.mrb[0].mxu0
  %v782 = vadd.f32 %v130, %v781
  %v783 = vpop.f32.mrb[0].mxu0
  %784 = vmatprep.mubr.f32.mxu0 0.0
  %785 = vmatmul.mubr.f32.gmra.mrb[0].mxu0 %v311
  %v786 = vpop.f32.mrb[0].mxu0
  %v787 = vadd.f32 %v130, %v786
  %v788 = vpop.f32.mrb[0].mxu0
  %789 = vmatprep.mubr.f32.mxu0 0.0
  %790 = vmatmul.mubr.f32.gmra.mrb[0].mxu0 %v314
  %v791 = vpop.f32.mrb[0].mxu0
  %v792 = vadd.f32 %v130, %v791
  %v793 = vpop.f32.mrb[0].mxu0
  %794 = vmatprep.mubr.f32.mxu0 0.0
  %795 = vmatmul.mubr.f32.gmra.mrb[0].mxu0 %v317
  %v796 = vpop.f32.mrb[0].mxu0
  %v797 = vadd.f32 %v130, %v796
  %v798 = vpop.f32.mrb[0].mxu0
  %799 = vmatprep.mubr.f32.mxu0 0.0
  %800 = vmatmul.mubr.f32.gmra.mrb[0].mxu0 %v320
  %v801 = vpop.f32.mrb[0].mxu0
  %v802 = vadd.f32 %v130, %v801
  %v803 = vpop.f32.mrb[0].mxu0
  %804 = vmatprep.mubr.f32.mxu0 0.0
  %805 = vmatmul.mubr.f32.gmra.mrb[0].mxu0 %v323
  %v806 = vpop.f32.mrb[0].mxu0
  %v807 = vadd.f32 %v130, %v806
  %v808 = vpop.f32.mrb[0].mxu0
  %809 = vmatprep.mubr.f32.mxu0 0.0
  %810 = vmatmul.mubr.f32.gmra.mrb[0].mxu0 %v326
  %v811 = vpop.f32.mrb[0].mxu0
  %v812 = vadd.f32 %v130, %v811
  %v813 = vpop.f32.mrb[0].mxu0
  %814 = vmatprep.mubr.f32.mxu0 0.0
  %815 = vmatmul.mubr.f32.gmra.mrb[0].mxu0 %v329
  %v816 = vpop.f32.mrb[0].mxu0
  %v817 = vadd.f32 %v130, %v816
  %v818 = vpop.f32.mrb[0].mxu0
  %819 = vmatprep.mubr.f32.mxu0 0.0
  %820 = vmatmul.mubr.f32.gmra.mrb[0].mxu0 %v332
  %v821 = vpop.f32.mrb[0].mxu0
  %v822 = vadd.f32 %v130, %v821
  %v823 = vpop.f32.mrb[0].mxu0
  %824 = vmatprep.mubr.f32.mxu0 0.0
  %825 = vmatmul.mubr.f32.gmra.mrb[0].mxu0 %v335
  %v826 = vpop.f32.mrb[0].mxu0
  %v827 = vadd.f32 %v130, %v826
  %v828 = vpop.f32.mrb[0].mxu0
  %829 = vmatprep.mubr.f32.mxu0 0.0
  %830 = vmatmul.mubr.f32.gmra.mrb[0].mxu0 %v338
  %v831 = vpop.f32.mrb[0].mxu0
  %v832 = vadd.f32 %v130, %v831
  %v833 = vpop.f32.mrb[0].mxu0
  %834 = vmatprep.mubr.f32.mxu0 0.0
  %835 = vmatmul.mubr.f32.gmra.mrb[0].mxu0 %v341
  %v836 = vpop.f32.mrb[0].mxu0
  %v837 = vadd.f32 %v130, %v836
  %v838 = vpop.f32.mrb[0].mxu0
  %839 = vmatprep.mubr.f32.mxu0 0.0
  %840 = vmatmul.mubr.f32.gmra.mrb[0].mxu0 %v344
  %v841 = vpop.f32.mrb[0].mxu0
  %v842 = vadd.f32 %v130, %v841
  %v843 = vpop.f32.mrb[0].mxu0
  %844 = vmatprep.mubr.f32.mxu0 0.0
  %845 = vmatmul.mubr.f32.gmra.mrb[0].mxu0 %v347
  %v846 = vpop.f32.mrb[0].mxu0
  %v847 = vadd.f32 %v130, %v846
  %v848 = vpop.f32.mrb[0].mxu0
  %849 = vmatprep.mubr.f32.mxu0 0.0
  %850 = vmatmul.mubr.f32.gmra.mrb[0].mxu0 %v350
  %v851 = vpop.f32.mrb[0].mxu0
  %v852 = vadd.f32 %v130, %v851
  %v853 = vpop.f32.mrb[0].mxu0
  %854 = vmatprep.mubr.f32.mxu0 0.0
  %855 = vmatmul.mubr.f32.gmra.mrb[0].mxu0 %v353
  %v856 = vpop.f32.mrb[0].mxu0
  %v857 = vadd.f32 %v130, %v856
  %v858 = vpop.f32.mrb[0].mxu0
  %859 = vmatprep.mubr.f32.mxu0 0.0
  %860 = vmatmul.mubr.f32.gmra.mrb[0].mxu0 %v356
  %v861 = vpop.f32.mrb[0].mxu0
  %v862 = vadd.f32 %v130, %v861
  %v863 = vpop.f32.mrb[0].mxu0
  %864 = vmatprep.mubr.f32.mxu0 0.0
  %865 = vmatmul.mubr.f32.gmra.mrb[0].mxu0 %v359
  %v866 = vpop.f32.mrb[0].mxu0
  %v867 = vadd.f32 %v130, %v866
  %v868 = vpop.f32.mrb[0].mxu0
  %869 = vmatprep.mubr.f32.mxu0 0.0
  %870 = vmatmul.mubr.f32.gmra.mrb[0].mxu0 %v362
  %v871 = vpop.f32.mrb[0].mxu0
  %v872 = vadd.f32 %v130, %v871
  %v873 = vpop.f32.mrb[0].mxu0
  %874 = vmatprep.mubr.f32.mxu0 0.0
  %875 = vmatmul.mubr.f32.gmra.mrb[0].mxu0 %v365
  %v876 = vpop.f32.mrb[0].mxu0
  %v877 = vadd.f32 %v130, %v876
  %v878 = vpop.f32.mrb[0].mxu0
  %879 = vmatprep.mubr.f32.mxu0 0.0
  %880 = vmatmul.mubr.f32.gmra.mrb[0].mxu0 %v368
  %v881 = vpop.f32.mrb[0].mxu0
  %v882 = vadd.f32 %v130, %v881
  %v883 = vpop.f32.mrb[0].mxu0
  %884 = vmatprep.mubr.f32.mxu0 0.0
  %885 = vmatmul.mubr.f32.gmra.mrb[0].mxu0 %v371
  %v886 = vpop.f32.mrb[0].mxu0
  %v887 = vadd.f32 %v130, %v886
  %v888 = vpop.f32.mrb[0].mxu0
  %889 = vmatprep.mubr.f32.mxu0 0.0
  %890 = vmatmul.mubr.f32.gmra.mrb[0].mxu0 %v374
  %v891 = vpop.f32.mrb[0].mxu0
  %v892 = vadd.f32 %v130, %v891
  %v893 = vpop.f32.mrb[0].mxu0
  %894 = vmatprep.mubr.f32.mxu0 0.0
  %895 = vmatmul.mubr.f32.gmra.mrb[0].mxu0 %v377
  %v896 = vpop.f32.mrb[0].mxu0
  %v897 = vadd.f32 %v130, %v896
  %v898 = vpop.f32.mrb[0].mxu0
  %899 = vmatprep.mubr.f32.mxu0 0.0
  %900 = vmatmul.mubr.f32.gmra.mrb[0].mxu0 %v380
  %v901 = vpop.f32.mrb[0].mxu0
  %v902 = vadd.f32 %v130, %v901
  %v903 = vpop.f32.mrb[0].mxu0
  %904 = vmatprep.mubr.f32.mxu0 0.0
  %905 = vmatmul.mubr.f32.gmra.mrb[0].mxu0 %v383
  %v906 = vpop.f32.mrb[0].mxu0
  %v907 = vadd.f32 %v130, %v906
  %v908 = vpop.f32.mrb[0].mxu0
  %909 = vmatprep.mubr.f32.mxu0 0.0
  %910 = vmatmul.mubr.f32.gmra.mrb[0].mxu0 %v386
  %v911 = vpop.f32.mrb[0].mxu0
  %v912 = vadd.f32 %v130, %v911
  %v913 = vpop.f32.mrb[0].mxu0
  %914 = vmatprep.mubr.f32.mxu0 0.0
  %915 = vmatmul.mubr.f32.gmra.mrb[0].mxu0 %v389
  %v916 = vpop.f32.mrb[0].mxu0
  %v917 = vadd.f32 %v130, %v916
  %v918 = vpop.f32.mrb[0].mxu0
  %919 = vmatprep.mubr.f32.mxu0 0.0
  %920 = vmatmul.mubr.f32.gmra.mrb[0].mxu0 %v392
  %v921 = vpop.f32.mrb[0].mxu0
  %v922 = vadd.f32 %v130, %v921
  %v923 = vpop.f32.mrb[0].mxu0
  %924 = vmatprep.mubr.f32.mxu0 0.0
  %925 = vmatmul.mubr.f32.gmra.mrb[0].mxu0 %v395
  %v926 = vpop.f32.mrb[0].mxu0
  %v927 = vadd.f32 %v130, %v926
  %v928 = vpop.f32.mrb[0].mxu0
  %929 = vmatprep.mubr.f32.mxu0 0.0
  %930 = vmatmul.mubr.f32.gmra.mrb[0].mxu0 %v398
  %v931 = vpop.f32.mrb[0].mxu0
  %v932 = vadd.f32 %v130, %v931
  %v933 = vpop.f32.mrb[0].mxu0
  %934 = vmatprep.mubr.f32.mxu0 0.0
  %935 = vmatmul.mubr.f32.gmra.mrb[0].mxu0 %v401
  %v936 = vpop.f32.mrb[0].mxu0
  %v937 = vadd.f32 %v130, %v936
  %v938 = vpop.f32.mrb[0].mxu0
  %939 = vmatprep.mubr.f32.mxu0 0.0
  %940 = vmatmul.mubr.f32.gmra.mrb[0].mxu0 %v404
  %v941 = vpop.f32.mrb[0].mxu0
  %v942 = vadd.f32 %v130, %v941
  %v943 = vpop.f32.mrb[0].mxu0
  %944 = vmatprep.mubr.f32.mxu0 0.0
  %945 = vmatmul.mubr.f32.gmra.mrb[0].mxu0 %v407
  %v946 = vpop.f32.mrb[0].mxu0
  %v947 = vadd.f32 %v130, %v946
  %v948 = vpop.f32.mrb[0].mxu0
  %949 = vmatprep.mubr.f32.mxu0 0.0
  %950 = vmatmul.mubr.f32.gmra.mrb[0].mxu0 %v410
  %v951 = vpop.f32.mrb[0].mxu0
  %v952 = vadd.f32 %v130, %v951
  %v953 = vpop.f32.mrb[0].mxu0
  %954 = vmatprep.mubr.f32.mxu0 0.0
  %955 = vmatmul.mubr.f32.gmra.mrb[0].mxu0 %v413
  %v956 = vpop.f32.mrb[0].mxu0
  %v957 = vadd.f32 %v130, %v956
  %v958 = vpop.f32.mrb[0].mxu0
  %959 = vmatprep.mubr.f32.mxu0 0.0
  %960 = vmatmul.mubr.f32.gmra.mrb[0].mxu0 %v416
  %v961 = vpop.f32.mrb[0].mxu0
  %v962 = vadd.f32 %v130, %v961
  %v963 = vpop.f32.mrb[0].mxu0
  %964 = vmatprep.mubr.f32.mxu0 0.0
  %965 = vmatmul.mubr.f32.gmra.mrb[0].mxu0 %v419
  %v966 = vpop.f32.mrb[0].mxu0
  %v967 = vadd.f32 %v130, %v966
  %v968 = vpop.f32.mrb[0].mxu0
  %969 = vdwg.mxu0
  %v970 = vmax.f32 %v492, 0.0
  %v971 = vmax.f32 %v497, 0.0
  %v972 = vmax.f32 %v502, 0.0
  %v973 = vmax.f32 %v507, 0.0
  %v974 = vmax.f32 %v512, 0.0
  %v975 = vmax.f32 %v517, 0.0
  %v976 = vmax.f32 %v522, 0.0
  %v977 = vmax.f32 %v527, 0.0
  %v978 = vmax.f32 %v532, 0.0
  %v979 = vmax.f32 %v537, 0.0
  %v980 = vmax.f32 %v542, 0.0
  %v981 = vmax.f32 %v547, 0.0
  %v982 = vmax.f32 %v552, 0.0
  %v983 = vmax.f32 %v557, 0.0
  %v984 = vmax.f32 %v562, 0.0
  %v985 = vmax.f32 %v567, 0.0
  %v986 = vmax.f32 %v572, 0.0
  %v987 = vmax.f32 %v577, 0.0
  %v988 = vmax.f32 %v582, 0.0
  %v989 = vmax.f32 %v587, 0.0
  %v990 = vmax.f32 %v592, 0.0
  %v991 = vmax.f32 %v597, 0.0
  %v992 = vmax.f32 %v602, 0.0
  %v993 = vmax.f32 %v607, 0.0
  %v994 = vmax.f32 %v612, 0.0
  %v995 = vmax.f32 %v617, 0.0
  %v996 = vmax.f32 %v622, 0.0
  %v997 = vmax.f32 %v627, 0.0
  %v998 = vmax.f32 %v632, 0.0
  %v999 = vmax.f32 %v637, 0.0
  %v1000 = vmax.f32 %v642, 0.0
  %v1001 = vmax.f32 %v647, 0.0
  %v1002 = vmax.f32 %v652, 0.0
  %v1003 = vmax.f32 %v657, 0.0
  %v1004 = vmax.f32 %v662, 0.0
  %v1005 = vmax.f32 %v667, 0.0
  %v1006 = vmax.f32 %v672, 0.0
  %v1007 = vmax.f32 %v677, 0.0
  %v1008 = vmax.f32 %v682, 0.0
  %v1009 = vmax.f32 %v687, 0.0
  %v1010 = vmax.f32 %v692, 0.0
  %v1011 = vmax.f32 %v697, 0.0
  %v1012 = vmax.f32 %v702, 0.0
  %v1013 = vmax.f32 %v707, 0.0
  %v1014 = vmax.f32 %v712, 0.0
  %v1015 = vmax.f32 %v717, 0.0
  %v1016 = vmax.f32 %v722, 0.0
  %v1017 = vmax.f32 %v727, 0.0
  %v1018 = vmax.f32 %v732, 0.0
  %v1019 = vmax.f32 %v737, 0.0
  %v1020 = vmax.f32 %v742, 0.0
  %v1021 = vmax.f32 %v747, 0.0
  %v1022 = vmax.f32 %v752, 0.0
  %v1023 = vmax.f32 %v757, 0.0
  %v1024 = vmax.f32 %v762, 0.0
  %v1025 = vmax.f32 %v767, 0.0
  %v1026 = vmax.f32 %v772, 0.0
  %v1027 = vmax.f32 %v777, 0.0
  %v1028 = vmax.f32 %v782, 0.0
  %v1029 = vmax.f32 %v787, 0.0
  %v1030 = vmax.f32 %v792, 0.0
  %v1031 = vmax.f32 %v797, 0.0
  %v1032 = vmax.f32 %v802, 0.0
  %v1033 = vmax.f32 %v807, 0.0
  %v1034 = vmax.f32 %v812, 0.0
  %v1035 = vmax.f32 %v817, 0.0
  %v1036 = vmax.f32 %v822, 0.0
  %v1037 = vmax.f32 %v827, 0.0
  %v1038 = vmax.f32 %v832, 0.0
  %v1039 = vmax.f32 %v837, 0.0
  %v1040 = vmax.f32 %v842, 0.0
  %v1041 = vmax.f32 %v847, 0.0
  %v1042 = vmax.f32 %v852, 0.0
  %v1043 = vmax.f32 %v857, 0.0
  %v1044 = vmax.f32 %v862, 0.0
  %v1045 = vmax.f32 %v867, 0.0
  %v1046 = vmax.f32 %v872, 0.0
  %v1047 = vmax.f32 %v877, 0.0
  %v1048 = vmax.f32 %v882, 0.0
  %v1049 = vmax.f32 %v887, 0.0
  %v1050 = vmax.f32 %v892, 0.0
  %v1051 = vmax.f32 %v897, 0.0
  %v1052 = vmax.f32 %v902, 0.0
  %v1053 = vmax.f32 %v907, 0.0
  %v1054 = vmax.f32 %v912, 0.0
  %v1055 = vmax.f32 %v917, 0.0
  %v1056 = vmax.f32 %v922, 0.0
  %v1057 = vmax.f32 %v927, 0.0
  %v1058 = vmax.f32 %v932, 0.0
  %v1059 = vmax.f32 %v937, 0.0
  %v1060 = vmax.f32 %v942, 0.0
  %v1061 = vmax.f32 %v947, 0.0
  %v1062 = vmax.f32 %v952, 0.0
  %v1063 = vmax.f32 %v957, 0.0
  %v1064 = vmax.f32 %v962, 0.0
  %v1065 = vmax.f32 %v967, 0.0
  %v1066 = vld [vmem:[%s3] sm:$0xff]
  %v1067 = vld [vmem:[%s3 + $0x8] sm:$0xff]
  %v1068 = vld [vmem:[%s3 + $0x10] sm:$0xff]
  %v1069 = vld [vmem:[%s3 + $0x18] sm:$0xff]
  %v1070 = vld [vmem:[%s3 + $0x20] sm:$0xff]
  %v1071 = vld [vmem:[%s3 + $0x28] sm:$0xff]
  %v1072 = vld [vmem:[%s3 + $0x30] sm:$0xff]
  %v1073 = vld [vmem:[%s3 + $0x38] sm:$0xff]
  %v1074 = vld [vmem:[%s4] sm:$0x1]
  %v1076 = vlaneseq
  %v1077 = vshrl.u32 %v1076, 7
  %v1078 = vsub.s32 0, %v1077
  %v1079 = vrot.slane %v1074, %v1078
  %vm1081 = vcmask 523264
  %v1083 = vsel %vm1081, %v970, 0
  %v1086 = vsel %vm1081, %v971, 0
  %v1089 = vsel %vm1081, %v972, 0
  %v1092 = vsel %vm1081, %v973, 0
  %v1095 = vsel %vm1081, %v974, 0
  %v1098 = vsel %vm1081, %v975, 0
  %v1101 = vsel %vm1081, %v976, 0
  %v1104 = vsel %vm1081, %v977, 0
  %v1107 = vsel %vm1081, %v978, 0
  %v1110 = vsel %vm1081, %v979, 0
  %v1113 = vsel %vm1081, %v980, 0
  %v1116 = vsel %vm1081, %v981, 0
  %v1119 = vsel %vm1081, %v982, 0
  %v1122 = vsel %vm1081, %v983, 0
  %v1125 = vsel %vm1081, %v984, 0
  %v1128 = vsel %vm1081, %v985, 0
  %v1131 = vsel %vm1081, %v986, 0
  %v1134 = vsel %vm1081, %v987, 0
  %v1137 = vsel %vm1081, %v988, 0
  %v1140 = vsel %vm1081, %v989, 0
  %v1143 = vsel %vm1081, %v990, 0
  %v1146 = vsel %vm1081, %v991, 0
  %v1149 = vsel %vm1081, %v992, 0
  %v1152 = vsel %vm1081, %v993, 0
  %v1155 = vsel %vm1081, %v994, 0
  %v1158 = vsel %vm1081, %v995, 0
  %v1161 = vsel %vm1081, %v996, 0
  %v1164 = vsel %vm1081, %v997, 0
  %v1167 = vsel %vm1081, %v998, 0
  %v1170 = vsel %vm1081, %v999, 0
  %v1173 = vsel %vm1081, %v1000, 0
  %v1176 = vsel %vm1081, %v1001, 0
  %v1179 = vsel %vm1081, %v1002, 0
  %v1182 = vsel %vm1081, %v1003, 0
  %v1185 = vsel %vm1081, %v1004, 0
  %v1188 = vsel %vm1081, %v1005, 0
  %v1191 = vsel %vm1081, %v1006, 0
  %v1194 = vsel %vm1081, %v1007, 0
  %v1197 = vsel %vm1081, %v1008, 0
  %v1200 = vsel %vm1081, %v1009, 0
  %v1203 = vsel %vm1081, %v1010, 0
  %v1206 = vsel %vm1081, %v1011, 0
  %v1209 = vsel %vm1081, %v1012, 0
  %v1212 = vsel %vm1081, %v1013, 0
  %v1215 = vsel %vm1081, %v1014, 0
  %v1218 = vsel %vm1081, %v1015, 0
  %v1221 = vsel %vm1081, %v1016, 0
  %v1224 = vsel %vm1081, %v1017, 0
  %v1227 = vsel %vm1081, %v1018, 0
  %v1230 = vsel %vm1081, %v1019, 0
  %v1233 = vsel %vm1081, %v1020, 0
  %v1236 = vsel %vm1081, %v1021, 0
  %v1239 = vsel %vm1081, %v1022, 0
  %v1242 = vsel %vm1081, %v1023, 0
  %v1245 = vsel %vm1081, %v1024, 0
  %v1248 = vsel %vm1081, %v1025, 0
  %v1251 = vsel %vm1081, %v1026, 0
  %v1254 = vsel %vm1081, %v1027, 0
  %v1257 = vsel %vm1081, %v1028, 0
  %v1260 = vsel %vm1081, %v1029, 0
  %v1263 = vsel %vm1081, %v1030, 0
  %v1266 = vsel %vm1081, %v1031, 0
  %v1269 = vsel %vm1081, %v1032, 0
  %v1272 = vsel %vm1081, %v1033, 0
  %v1275 = vsel %vm1081, %v1034, 0
  %v1278 = vsel %vm1081, %v1035, 0
  %v1281 = vsel %vm1081, %v1036, 0
  %v1284 = vsel %vm1081, %v1037, 0
  %v1287 = vsel %vm1081, %v1038, 0
  %v1290 = vsel %vm1081, %v1039, 0
  %v1293 = vsel %vm1081, %v1040, 0
  %v1296 = vsel %vm1081, %v1041, 0
  %v1299 = vsel %vm1081, %v1042, 0
  %v1302 = vsel %vm1081, %v1043, 0
  %v1305 = vsel %vm1081, %v1044, 0
  %v1308 = vsel %vm1081, %v1045, 0
  %v1311 = vsel %vm1081, %v1046, 0
  %v1314 = vsel %vm1081, %v1047, 0
  %v1317 = vsel %vm1081, %v1048, 0
  %v1320 = vsel %vm1081, %v1049, 0
  %v1323 = vsel %vm1081, %v1050, 0
  %v1326 = vsel %vm1081, %v1051, 0
  %v1329 = vsel %vm1081, %v1052, 0
  %v1332 = vsel %vm1081, %v1053, 0
  %v1335 = vsel %vm1081, %v1054, 0
  %v1338 = vsel %vm1081, %v1055, 0
  %v1341 = vsel %vm1081, %v1056, 0
  %v1344 = vsel %vm1081, %v1057, 0
  %v1347 = vsel %vm1081, %v1058, 0
  %v1350 = vsel %vm1081, %v1059, 0
  %v1353 = vsel %vm1081, %v1060, 0
  %v1356 = vsel %vm1081, %v1061, 0
  %v1359 = vsel %vm1081, %v1062, 0
  %v1362 = vsel %vm1081, %v1063, 0
  %v1365 = vsel %vm1081, %v1064, 0
  %v1368 = vsel %vm1081, %v1065, 0
  %1370 = vmatprep.subr.mxu0 0.0
  %1371 = vmatpush1.msra.mxu0 %v1066
  %1372 = vmatprep.subr.mxu0 0.0
  %1373 = vmatpush1.msra.mxu0 %v1067
  %1374 = vmatprep.subr.mxu0 0.0
  %1375 = vmatpush1.msra.mxu0 %v1068
  %1376 = vmatprep.subr.mxu0 0.0
  %1377 = vmatpush1.msra.mxu0 %v1069
  %1378 = vmatprep.subr.mxu0 0.0
  %1379 = vmatpush1.msra.mxu0 %v1070
  %1380 = vmatprep.subr.mxu0 0.0
  %1381 = vmatpush1.msra.mxu0 %v1071
  %1382 = vmatprep.subr.mxu0 0.0
  %1383 = vmatpush1.msra.mxu0 %v1072
  %1384 = vmatprep.subr.mxu0 0.0
  %1385 = vmatpush1.msra.mxu0 %v1073
  %1386 = vmatprep.subr.mxu0 0.0
  %1387 = vmatpush1.msra.mxu0 0.0
  %1388 = vmatprep.subr.mxu0 0.0
  %1389 = vmatpush1.msra.mxu0 0.0
  %1390 = vmatprep.subr.mxu0 0.0
  %1391 = vmatpush1.msra.mxu0 0.0
  %1392 = vmatprep.subr.mxu0 0.0
  %1393 = vmatpush1.msra.mxu0 0.0
  %1394 = vmatprep.subr.mxu0 0.0
  %1395 = vmatpush1.msra.mxu0 0.0
  %1396 = vmatprep.subr.mxu0 0.0
  %1397 = vmatpush1.msra.mxu0 0.0
  %1398 = vmatprep.subr.mxu0 0.0
  %1399 = vmatpush1.msra.mxu0 0.0
  %1400 = vmatprep.subr.mxu0 0.0
  %1401 = vmatpush1.msra.mxu0 0.0
  %1402 = vmatprep.subr.mxu0 0.0
  %1403 = vmatpush1.msra.mxu0 0.0
  %1404 = vmatprep.subr.mxu0 0.0
  %1405 = vmatpush1.msra.mxu0 0.0
  %1406 = vmatprep.subr.mxu0 0.0
  %1407 = vmatpush1.msra.mxu0 0.0
  %1408 = vmatprep.subr.mxu0 0.0
  %1409 = vmatpush1.msra.mxu0 0.0
  %1410 = vmatprep.subr.mxu0 0.0
  %1411 = vmatpush1.msra.mxu0 0.0
  %1412 = vmatprep.subr.mxu0 0.0
  %1413 = vmatpush1.msra.mxu0 0.0
  %1414 = vmatprep.subr.mxu0 0.0
  %1415 = vmatpush1.msra.mxu0 0.0
  %1416 = vmatprep.subr.mxu0 0.0
  %1417 = vmatpush1.msra.mxu0 0.0
  %1418 = vmatprep.subr.mxu0 0.0
  %1419 = vmatpush1.msra.mxu0 0.0
  %1420 = vmatprep.subr.mxu0 0.0
  %1421 = vmatpush1.msra.mxu0 0.0
  %1422 = vmatprep.subr.mxu0 0.0
  %1423 = vmatpush1.msra.mxu0 0.0
  %1424 = vmatprep.subr.mxu0 0.0
  %1425 = vmatpush1.msra.mxu0 0.0
  %1426 = vmatprep.subr.mxu0 0.0
  %1427 = vmatpush1.msra.mxu0 0.0
  %1428 = vmatprep.subr.mxu0 0.0
  %1429 = vmatpush1.msra.mxu0 0.0
  %1430 = vmatprep.subr.mxu0 0.0
  %1431 = vmatpush1.msra.mxu0 0.0
  %1432 = vmatprep.subr.mxu0 0.0
  %1433 = vmatpush1.msra.mxu0 0.0
  %1434 = vmatprep.mubr.f32.mxu0 0.0
  %1435 = vmatmul.mubr.f32.gmra.mrb[0].mxu0 %v1083
  %v1436 = vpop.f32.mrb[0].mxu0
  %v1437 = vadd.f32 %v1079, %v1436
  %v1438 = vpop.f32.mrb[0].mxu0
  %1439 = vmatprep.mubr.f32.mxu0 0.0
  %1440 = vmatmul.mubr.f32.gmra.mrb[0].mxu0 %v1086
  %v1441 = vpop.f32.mrb[0].mxu0
  %v1442 = vadd.f32 %v1079, %v1441
  %v1443 = vpop.f32.mrb[0].mxu0
  %1444 = vmatprep.mubr.f32.mxu0 0.0
  %1445 = vmatmul.mubr.f32.gmra.mrb[0].mxu0 %v1089
  %v1446 = vpop.f32.mrb[0].mxu0
  %v1447 = vadd.f32 %v1079, %v1446
  %v1448 = vpop.f32.mrb[0].mxu0
  %1449 = vmatprep.mubr.f32.mxu0 0.0
  %1450 = vmatmul.mubr.f32.gmra.mrb[0].mxu0 %v1092
  %v1451 = vpop.f32.mrb[0].mxu0
  %v1452 = vadd.f32 %v1079, %v1451
  %v1453 = vpop.f32.mrb[0].mxu0
  %1454 = vmatprep.mubr.f32.mxu0 0.0
  %1455 = vmatmul.mubr.f32.gmra.mrb[0].mxu0 %v1095
  %v1456 = vpop.f32.mrb[0].mxu0
  %v1457 = vadd.f32 %v1079, %v1456
  %v1458 = vpop.f32.mrb[0].mxu0
  %1459 = vmatprep.mubr.f32.mxu0 0.0
  %1460 = vmatmul.mubr.f32.gmra.mrb[0].mxu0 %v1098
  %v1461 = vpop.f32.mrb[0].mxu0
  %v1462 = vadd.f32 %v1079, %v1461
  %v1463 = vpop.f32.mrb[0].mxu0
  %1464 = vmatprep.mubr.f32.mxu0 0.0
  %1465 = vmatmul.mubr.f32.gmra.mrb[0].mxu0 %v1101
  %v1466 = vpop.f32.mrb[0].mxu0
  %v1467 = vadd.f32 %v1079, %v1466
  %v1468 = vpop.f32.mrb[0].mxu0
  %1469 = vmatprep.mubr.f32.mxu0 0.0
  %1470 = vmatmul.mubr.f32.gmra.mrb[0].mxu0 %v1104
  %v1471 = vpop.f32.mrb[0].mxu0
  %v1472 = vadd.f32 %v1079, %v1471
  %v1473 = vpop.f32.mrb[0].mxu0
  %1474 = vmatprep.mubr.f32.mxu0 0.0
  %1475 = vmatmul.mubr.f32.gmra.mrb[0].mxu0 %v1107
  %v1476 = vpop.f32.mrb[0].mxu0
  %v1477 = vadd.f32 %v1079, %v1476
  %v1478 = vpop.f32.mrb[0].mxu0
  %1479 = vmatprep.mubr.f32.mxu0 0.0
  %1480 = vmatmul.mubr.f32.gmra.mrb[0].mxu0 %v1110
  %v1481 = vpop.f32.mrb[0].mxu0
  %v1482 = vadd.f32 %v1079, %v1481
  %v1483 = vpop.f32.mrb[0].mxu0
  %1484 = vmatprep.mubr.f32.mxu0 0.0
  %1485 = vmatmul.mubr.f32.gmra.mrb[0].mxu0 %v1113
  %v1486 = vpop.f32.mrb[0].mxu0
  %v1487 = vadd.f32 %v1079, %v1486
  %v1488 = vpop.f32.mrb[0].mxu0
  %1489 = vmatprep.mubr.f32.mxu0 0.0
  %1490 = vmatmul.mubr.f32.gmra.mrb[0].mxu0 %v1116
  %v1491 = vpop.f32.mrb[0].mxu0
  %v1492 = vadd.f32 %v1079, %v1491
  %v1493 = vpop.f32.mrb[0].mxu0
  %1494 = vmatprep.mubr.f32.mxu0 0.0
  %1495 = vmatmul.mubr.f32.gmra.mrb[0].mxu0 %v1119
  %v1496 = vpop.f32.mrb[0].mxu0
  %v1497 = vadd.f32 %v1079, %v1496
  %v1498 = vpop.f32.mrb[0].mxu0
  %1499 = vmatprep.mubr.f32.mxu0 0.0
  %1500 = vmatmul.mubr.f32.gmra.mrb[0].mxu0 %v1122
  %v1501 = vpop.f32.mrb[0].mxu0
  %v1502 = vadd.f32 %v1079, %v1501
  %v1503 = vpop.f32.mrb[0].mxu0
  %1504 = vmatprep.mubr.f32.mxu0 0.0
  %1505 = vmatmul.mubr.f32.gmra.mrb[0].mxu0 %v1125
  %v1506 = vpop.f32.mrb[0].mxu0
  %v1507 = vadd.f32 %v1079, %v1506
  %v1508 = vpop.f32.mrb[0].mxu0
  %1509 = vmatprep.mubr.f32.mxu0 0.0
  %1510 = vmatmul.mubr.f32.gmra.mrb[0].mxu0 %v1128
  %v1511 = vpop.f32.mrb[0].mxu0
  %v1512 = vadd.f32 %v1079, %v1511
  %v1513 = vpop.f32.mrb[0].mxu0
  %1514 = vmatprep.mubr.f32.mxu0 0.0
  %1515 = vmatmul.mubr.f32.gmra.mrb[0].mxu0 %v1131
  %v1516 = vpop.f32.mrb[0].mxu0
  %v1517 = vadd.f32 %v1079, %v1516
  %v1518 = vpop.f32.mrb[0].mxu0
  %1519 = vmatprep.mubr.f32.mxu0 0.0
  %1520 = vmatmul.mubr.f32.gmra.mrb[0].mxu0 %v1134
  %v1521 = vpop.f32.mrb[0].mxu0
  %v1522 = vadd.f32 %v1079, %v1521
  %v1523 = vpop.f32.mrb[0].mxu0
  %1524 = vmatprep.mubr.f32.mxu0 0.0
  %1525 = vmatmul.mubr.f32.gmra.mrb[0].mxu0 %v1137
  %v1526 = vpop.f32.mrb[0].mxu0
  %v1527 = vadd.f32 %v1079, %v1526
  %v1528 = vpop.f32.mrb[0].mxu0
  %1529 = vmatprep.mubr.f32.mxu0 0.0
  %1530 = vmatmul.mubr.f32.gmra.mrb[0].mxu0 %v1140
  %v1531 = vpop.f32.mrb[0].mxu0
  %v1532 = vadd.f32 %v1079, %v1531
  %v1533 = vpop.f32.mrb[0].mxu0
  %1534 = vmatprep.mubr.f32.mxu0 0.0
  %1535 = vmatmul.mubr.f32.gmra.mrb[0].mxu0 %v1143
  %v1536 = vpop.f32.mrb[0].mxu0
  %v1537 = vadd.f32 %v1079, %v1536
  %v1538 = vpop.f32.mrb[0].mxu0
  %1539 = vmatprep.mubr.f32.mxu0 0.0
  %1540 = vmatmul.mubr.f32.gmra.mrb[0].mxu0 %v1146
  %v1541 = vpop.f32.mrb[0].mxu0
  %v1542 = vadd.f32 %v1079, %v1541
  %v1543 = vpop.f32.mrb[0].mxu0
  %1544 = vmatprep.mubr.f32.mxu0 0.0
  %1545 = vmatmul.mubr.f32.gmra.mrb[0].mxu0 %v1149
  %v1546 = vpop.f32.mrb[0].mxu0
  %v1547 = vadd.f32 %v1079, %v1546
  %v1548 = vpop.f32.mrb[0].mxu0
  %1549 = vmatprep.mubr.f32.mxu0 0.0
  %1550 = vmatmul.mubr.f32.gmra.mrb[0].mxu0 %v1152
  %v1551 = vpop.f32.mrb[0].mxu0
  %v1552 = vadd.f32 %v1079, %v1551
  %v1553 = vpop.f32.mrb[0].mxu0
  %1554 = vmatprep.mubr.f32.mxu0 0.0
  %1555 = vmatmul.mubr.f32.gmra.mrb[0].mxu0 %v1155
  %v1556 = vpop.f32.mrb[0].mxu0
  %v1557 = vadd.f32 %v1079, %v1556
  %v1558 = vpop.f32.mrb[0].mxu0
  %1559 = vmatprep.mubr.f32.mxu0 0.0
  %1560 = vmatmul.mubr.f32.gmra.mrb[0].mxu0 %v1158
  %v1561 = vpop.f32.mrb[0].mxu0
  %v1562 = vadd.f32 %v1079, %v1561
  %v1563 = vpop.f32.mrb[0].mxu0
  %1564 = vmatprep.mubr.f32.mxu0 0.0
  %1565 = vmatmul.mubr.f32.gmra.mrb[0].mxu0 %v1161
  %v1566 = vpop.f32.mrb[0].mxu0
  %v1567 = vadd.f32 %v1079, %v1566
  %v1568 = vpop.f32.mrb[0].mxu0
  %1569 = vmatprep.mubr.f32.mxu0 0.0
  %1570 = vmatmul.mubr.f32.gmra.mrb[0].mxu0 %v1164
  %v1571 = vpop.f32.mrb[0].mxu0
  %v1572 = vadd.f32 %v1079, %v1571
  %v1573 = vpop.f32.mrb[0].mxu0
  %1574 = vmatprep.mubr.f32.mxu0 0.0
  %1575 = vmatmul.mubr.f32.gmra.mrb[0].mxu0 %v1167
  %v1576 = vpop.f32.mrb[0].mxu0
  %v1577 = vadd.f32 %v1079, %v1576
  %v1578 = vpop.f32.mrb[0].mxu0
  %1579 = vmatprep.mubr.f32.mxu0 0.0
  %1580 = vmatmul.mubr.f32.gmra.mrb[0].mxu0 %v1170
  %v1581 = vpop.f32.mrb[0].mxu0
  %v1582 = vadd.f32 %v1079, %v1581
  %v1583 = vpop.f32.mrb[0].mxu0
  %1584 = vmatprep.mubr.f32.mxu0 0.0
  %1585 = vmatmul.mubr.f32.gmra.mrb[0].mxu0 %v1173
  %v1586 = vpop.f32.mrb[0].mxu0
  %v1587 = vadd.f32 %v1079, %v1586
  %v1588 = vpop.f32.mrb[0].mxu0
  %1589 = vmatprep.mubr.f32.mxu0 0.0
  %1590 = vmatmul.mubr.f32.gmra.mrb[0].mxu0 %v1176
  %v1591 = vpop.f32.mrb[0].mxu0
  %v1592 = vadd.f32 %v1079, %v1591
  %v1593 = vpop.f32.mrb[0].mxu0
  %1594 = vmatprep.mubr.f32.mxu0 0.0
  %1595 = vmatmul.mubr.f32.gmra.mrb[0].mxu0 %v1179
  %v1596 = vpop.f32.mrb[0].mxu0
  %v1597 = vadd.f32 %v1079, %v1596
  %v1598 = vpop.f32.mrb[0].mxu0
  %1599 = vmatprep.mubr.f32.mxu0 0.0
  %1600 = vmatmul.mubr.f32.gmra.mrb[0].mxu0 %v1182
  %v1601 = vpop.f32.mrb[0].mxu0
  %v1602 = vadd.f32 %v1079, %v1601
  %v1603 = vpop.f32.mrb[0].mxu0
  %1604 = vmatprep.mubr.f32.mxu0 0.0
  %1605 = vmatmul.mubr.f32.gmra.mrb[0].mxu0 %v1185
  %v1606 = vpop.f32.mrb[0].mxu0
  %v1607 = vadd.f32 %v1079, %v1606
  %v1608 = vpop.f32.mrb[0].mxu0
  %1609 = vmatprep.mubr.f32.mxu0 0.0
  %1610 = vmatmul.mubr.f32.gmra.mrb[0].mxu0 %v1188
  %v1611 = vpop.f32.mrb[0].mxu0
  %v1612 = vadd.f32 %v1079, %v1611
  %v1613 = vpop.f32.mrb[0].mxu0
  %1614 = vmatprep.mubr.f32.mxu0 0.0
  %1615 = vmatmul.mubr.f32.gmra.mrb[0].mxu0 %v1191
  %v1616 = vpop.f32.mrb[0].mxu0
  %v1617 = vadd.f32 %v1079, %v1616
  %v1618 = vpop.f32.mrb[0].mxu0
  %1619 = vmatprep.mubr.f32.mxu0 0.0
  %1620 = vmatmul.mubr.f32.gmra.mrb[0].mxu0 %v1194
  %v1621 = vpop.f32.mrb[0].mxu0
  %v1622 = vadd.f32 %v1079, %v1621
  %v1623 = vpop.f32.mrb[0].mxu0
  %1624 = vmatprep.mubr.f32.mxu0 0.0
  %1625 = vmatmul.mubr.f32.gmra.mrb[0].mxu0 %v1197
  %v1626 = vpop.f32.mrb[0].mxu0
  %v1627 = vadd.f32 %v1079, %v1626
  %v1628 = vpop.f32.mrb[0].mxu0
  %1629 = vmatprep.mubr.f32.mxu0 0.0
  %1630 = vmatmul.mubr.f32.gmra.mrb[0].mxu0 %v1200
  %v1631 = vpop.f32.mrb[0].mxu0
  %v1632 = vadd.f32 %v1079, %v1631
  %v1633 = vpop.f32.mrb[0].mxu0
  %1634 = vmatprep.mubr.f32.mxu0 0.0
  %1635 = vmatmul.mubr.f32.gmra.mrb[0].mxu0 %v1203
  %v1636 = vpop.f32.mrb[0].mxu0
  %v1637 = vadd.f32 %v1079, %v1636
  %v1638 = vpop.f32.mrb[0].mxu0
  %1639 = vmatprep.mubr.f32.mxu0 0.0
  %1640 = vmatmul.mubr.f32.gmra.mrb[0].mxu0 %v1206
  %v1641 = vpop.f32.mrb[0].mxu0
  %v1642 = vadd.f32 %v1079, %v1641
  %v1643 = vpop.f32.mrb[0].mxu0
  %1644 = vmatprep.mubr.f32.mxu0 0.0
  %1645 = vmatmul.mubr.f32.gmra.mrb[0].mxu0 %v1209
  %v1646 = vpop.f32.mrb[0].mxu0
  %v1647 = vadd.f32 %v1079, %v1646
  %v1648 = vpop.f32.mrb[0].mxu0
  %1649 = vmatprep.mubr.f32.mxu0 0.0
  %1650 = vmatmul.mubr.f32.gmra.mrb[0].mxu0 %v1212
  %v1651 = vpop.f32.mrb[0].mxu0
  %v1652 = vadd.f32 %v1079, %v1651
  %v1653 = vpop.f32.mrb[0].mxu0
  %1654 = vmatprep.mubr.f32.mxu0 0.0
  %1655 = vmatmul.mubr.f32.gmra.mrb[0].mxu0 %v1215
  %v1656 = vpop.f32.mrb[0].mxu0
  %v1657 = vadd.f32 %v1079, %v1656
  %v1658 = vpop.f32.mrb[0].mxu0
  %1659 = vmatprep.mubr.f32.mxu0 0.0
  %1660 = vmatmul.mubr.f32.gmra.mrb[0].mxu0 %v1218
  %v1661 = vpop.f32.mrb[0].mxu0
  %v1662 = vadd.f32 %v1079, %v1661
  %v1663 = vpop.f32.mrb[0].mxu0
  %1664 = vmatprep.mubr.f32.mxu0 0.0
  %1665 = vmatmul.mubr.f32.gmra.mrb[0].mxu0 %v1221
  %v1666 = vpop.f32.mrb[0].mxu0
  %v1667 = vadd.f32 %v1079, %v1666
  %v1668 = vpop.f32.mrb[0].mxu0
  %1669 = vmatprep.mubr.f32.mxu0 0.0
  %1670 = vmatmul.mubr.f32.gmra.mrb[0].mxu0 %v1224
  %v1671 = vpop.f32.mrb[0].mxu0
  %v1672 = vadd.f32 %v1079, %v1671
  %v1673 = vpop.f32.mrb[0].mxu0
  %1674 = vmatprep.mubr.f32.mxu0 0.0
  %1675 = vmatmul.mubr.f32.gmra.mrb[0].mxu0 %v1227
  %v1676 = vpop.f32.mrb[0].mxu0
  %v1677 = vadd.f32 %v1079, %v1676
  %v1678 = vpop.f32.mrb[0].mxu0
  %1679 = vmatprep.mubr.f32.mxu0 0.0
  %1680 = vmatmul.mubr.f32.gmra.mrb[0].mxu0 %v1230
  %v1681 = vpop.f32.mrb[0].mxu0
  %v1682 = vadd.f32 %v1079, %v1681
  %v1683 = vpop.f32.mrb[0].mxu0
  %1684 = vmatprep.mubr.f32.mxu0 0.0
  %1685 = vmatmul.mubr.f32.gmra.mrb[0].mxu0 %v1233
  %v1686 = vpop.f32.mrb[0].mxu0
  %v1687 = vadd.f32 %v1079, %v1686
  %v1688 = vpop.f32.mrb[0].mxu0
  %1689 = vmatprep.mubr.f32.mxu0 0.0
  %1690 = vmatmul.mubr.f32.gmra.mrb[0].mxu0 %v1236
  %v1691 = vpop.f32.mrb[0].mxu0
  %v1692 = vadd.f32 %v1079, %v1691
  %v1693 = vpop.f32.mrb[0].mxu0
  %1694 = vmatprep.mubr.f32.mxu0 0.0
  %1695 = vmatmul.mubr.f32.gmra.mrb[0].mxu0 %v1239
  %v1696 = vpop.f32.mrb[0].mxu0
  %v1697 = vadd.f32 %v1079, %v1696
  %v1698 = vpop.f32.mrb[0].mxu0
  %1699 = vmatprep.mubr.f32.mxu0 0.0
  %1700 = vmatmul.mubr.f32.gmra.mrb[0].mxu0 %v1242
  %v1701 = vpop.f32.mrb[0].mxu0
  %v1702 = vadd.f32 %v1079, %v1701
  %v1703 = vpop.f32.mrb[0].mxu0
  %1704 = vmatprep.mubr.f32.mxu0 0.0
  %1705 = vmatmul.mubr.f32.gmra.mrb[0].mxu0 %v1245
  %v1706 = vpop.f32.mrb[0].mxu0
  %v1707 = vadd.f32 %v1079, %v1706
  %v1708 = vpop.f32.mrb[0].mxu0
  %1709 = vmatprep.mubr.f32.mxu0 0.0
  %1710 = vmatmul.mubr.f32.gmra.mrb[0].mxu0 %v1248
  %v1711 = vpop.f32.mrb[0].mxu0
  %v1712 = vadd.f32 %v1079, %v1711
  %v1713 = vpop.f32.mrb[0].mxu0
  %1714 = vmatprep.mubr.f32.mxu0 0.0
  %1715 = vmatmul.mubr.f32.gmra.mrb[0].mxu0 %v1251
  %v1716 = vpop.f32.mrb[0].mxu0
  %v1717 = vadd.f32 %v1079, %v1716
  %v1718 = vpop.f32.mrb[0].mxu0
  %1719 = vmatprep.mubr.f32.mxu0 0.0
  %1720 = vmatmul.mubr.f32.gmra.mrb[0].mxu0 %v1254
  %v1721 = vpop.f32.mrb[0].mxu0
  %v1722 = vadd.f32 %v1079, %v1721
  %v1723 = vpop.f32.mrb[0].mxu0
  %1724 = vmatprep.mubr.f32.mxu0 0.0
  %1725 = vmatmul.mubr.f32.gmra.mrb[0].mxu0 %v1257
  %v1726 = vpop.f32.mrb[0].mxu0
  %v1727 = vadd.f32 %v1079, %v1726
  %v1728 = vpop.f32.mrb[0].mxu0
  %1729 = vmatprep.mubr.f32.mxu0 0.0
  %1730 = vmatmul.mubr.f32.gmra.mrb[0].mxu0 %v1260
  %v1731 = vpop.f32.mrb[0].mxu0
  %v1732 = vadd.f32 %v1079, %v1731
  %v1733 = vpop.f32.mrb[0].mxu0
  %1734 = vmatprep.mubr.f32.mxu0 0.0
  %1735 = vmatmul.mubr.f32.gmra.mrb[0].mxu0 %v1263
  %v1736 = vpop.f32.mrb[0].mxu0
  %v1737 = vadd.f32 %v1079, %v1736
  %v1738 = vpop.f32.mrb[0].mxu0
  %1739 = vmatprep.mubr.f32.mxu0 0.0
  %1740 = vmatmul.mubr.f32.gmra.mrb[0].mxu0 %v1266
  %v1741 = vpop.f32.mrb[0].mxu0
  %v1742 = vadd.f32 %v1079, %v1741
  %v1743 = vpop.f32.mrb[0].mxu0
  %1744 = vmatprep.mubr.f32.mxu0 0.0
  %1745 = vmatmul.mubr.f32.gmra.mrb[0].mxu0 %v1269
  %v1746 = vpop.f32.mrb[0].mxu0
  %v1747 = vadd.f32 %v1079, %v1746
  %v1748 = vpop.f32.mrb[0].mxu0
  %1749 = vmatprep.mubr.f32.mxu0 0.0
  %1750 = vmatmul.mubr.f32.gmra.mrb[0].mxu0 %v1272
  %v1751 = vpop.f32.mrb[0].mxu0
  %v1752 = vadd.f32 %v1079, %v1751
  %v1753 = vpop.f32.mrb[0].mxu0
  %1754 = vmatprep.mubr.f32.mxu0 0.0
  %1755 = vmatmul.mubr.f32.gmra.mrb[0].mxu0 %v1275
  %v1756 = vpop.f32.mrb[0].mxu0
  %v1757 = vadd.f32 %v1079, %v1756
  %v1758 = vpop.f32.mrb[0].mxu0
  %1759 = vmatprep.mubr.f32.mxu0 0.0
  %1760 = vmatmul.mubr.f32.gmra.mrb[0].mxu0 %v1278
  %v1761 = vpop.f32.mrb[0].mxu0
  %v1762 = vadd.f32 %v1079, %v1761
  %v1763 = vpop.f32.mrb[0].mxu0
  %1764 = vmatprep.mubr.f32.mxu0 0.0
  %1765 = vmatmul.mubr.f32.gmra.mrb[0].mxu0 %v1281
  %v1766 = vpop.f32.mrb[0].mxu0
  %v1767 = vadd.f32 %v1079, %v1766
  %v1768 = vpop.f32.mrb[0].mxu0
  %1769 = vmatprep.mubr.f32.mxu0 0.0
  %1770 = vmatmul.mubr.f32.gmra.mrb[0].mxu0 %v1284
  %v1771 = vpop.f32.mrb[0].mxu0
  %v1772 = vadd.f32 %v1079, %v1771
  %v1773 = vpop.f32.mrb[0].mxu0
  %1774 = vmatprep.mubr.f32.mxu0 0.0
  %1775 = vmatmul.mubr.f32.gmra.mrb[0].mxu0 %v1287
  %v1776 = vpop.f32.mrb[0].mxu0
  %v1777 = vadd.f32 %v1079, %v1776
  %v1778 = vpop.f32.mrb[0].mxu0
  %1779 = vmatprep.mubr.f32.mxu0 0.0
  %1780 = vmatmul.mubr.f32.gmra.mrb[0].mxu0 %v1290
  %v1781 = vpop.f32.mrb[0].mxu0
  %v1782 = vadd.f32 %v1079, %v1781
  %v1783 = vpop.f32.mrb[0].mxu0
  %1784 = vmatprep.mubr.f32.mxu0 0.0
  %1785 = vmatmul.mubr.f32.gmra.mrb[0].mxu0 %v1293
  %v1786 = vpop.f32.mrb[0].mxu0
  %v1787 = vadd.f32 %v1079, %v1786
  %v1788 = vpop.f32.mrb[0].mxu0
  %1789 = vmatprep.mubr.f32.mxu0 0.0
  %1790 = vmatmul.mubr.f32.gmra.mrb[0].mxu0 %v1296
  %v1791 = vpop.f32.mrb[0].mxu0
  %v1792 = vadd.f32 %v1079, %v1791
  %v1793 = vpop.f32.mrb[0].mxu0
  %1794 = vmatprep.mubr.f32.mxu0 0.0
  %1795 = vmatmul.mubr.f32.gmra.mrb[0].mxu0 %v1299
  %v1796 = vpop.f32.mrb[0].mxu0
  %v1797 = vadd.f32 %v1079, %v1796
  %v1798 = vpop.f32.mrb[0].mxu0
  %1799 = vmatprep.mubr.f32.mxu0 0.0
  %1800 = vmatmul.mubr.f32.gmra.mrb[0].mxu0 %v1302
  %v1801 = vpop.f32.mrb[0].mxu0
  %v1802 = vadd.f32 %v1079, %v1801
  %v1803 = vpop.f32.mrb[0].mxu0
  %1804 = vmatprep.mubr.f32.mxu0 0.0
  %1805 = vmatmul.mubr.f32.gmra.mrb[0].mxu0 %v1305
  %v1806 = vpop.f32.mrb[0].mxu0
  %v1807 = vadd.f32 %v1079, %v1806
  %v1808 = vpop.f32.mrb[0].mxu0
  %1809 = vmatprep.mubr.f32.mxu0 0.0
  %1810 = vmatmul.mubr.f32.gmra.mrb[0].mxu0 %v1308
  %v1811 = vpop.f32.mrb[0].mxu0
  %v1812 = vadd.f32 %v1079, %v1811
  %v1813 = vpop.f32.mrb[0].mxu0
  %1814 = vmatprep.mubr.f32.mxu0 0.0
  %1815 = vmatmul.mubr.f32.gmra.mrb[0].mxu0 %v1311
  %v1816 = vpop.f32.mrb[0].mxu0
  %v1817 = vadd.f32 %v1079, %v1816
  %v1818 = vpop.f32.mrb[0].mxu0
  %1819 = vmatprep.mubr.f32.mxu0 0.0
  %1820 = vmatmul.mubr.f32.gmra.mrb[0].mxu0 %v1314
  %v1821 = vpop.f32.mrb[0].mxu0
  %v1822 = vadd.f32 %v1079, %v1821
  %v1823 = vpop.f32.mrb[0].mxu0
  %1824 = vmatprep.mubr.f32.mxu0 0.0
  %1825 = vmatmul.mubr.f32.gmra.mrb[0].mxu0 %v1317
  %v1826 = vpop.f32.mrb[0].mxu0
  %v1827 = vadd.f32 %v1079, %v1826
  %v1828 = vpop.f32.mrb[0].mxu0
  %1829 = vmatprep.mubr.f32.mxu0 0.0
  %1830 = vmatmul.mubr.f32.gmra.mrb[0].mxu0 %v1320
  %v1831 = vpop.f32.mrb[0].mxu0
  %v1832 = vadd.f32 %v1079, %v1831
  %v1833 = vpop.f32.mrb[0].mxu0
  %1834 = vmatprep.mubr.f32.mxu0 0.0
  %1835 = vmatmul.mubr.f32.gmra.mrb[0].mxu0 %v1323
  %v1836 = vpop.f32.mrb[0].mxu0
  %v1837 = vadd.f32 %v1079, %v1836
  %v1838 = vpop.f32.mrb[0].mxu0
  %1839 = vmatprep.mubr.f32.mxu0 0.0
  %1840 = vmatmul.mubr.f32.gmra.mrb[0].mxu0 %v1326
  %v1841 = vpop.f32.mrb[0].mxu0
  %v1842 = vadd.f32 %v1079, %v1841
  %v1843 = vpop.f32.mrb[0].mxu0
  %1844 = vmatprep.mubr.f32.mxu0 0.0
  %1845 = vmatmul.mubr.f32.gmra.mrb[0].mxu0 %v1329
  %v1846 = vpop.f32.mrb[0].mxu0
  %v1847 = vadd.f32 %v1079, %v1846
  %v1848 = vpop.f32.mrb[0].mxu0
  %1849 = vmatprep.mubr.f32.mxu0 0.0
  %1850 = vmatmul.mubr.f32.gmra.mrb[0].mxu0 %v1332
  %v1851 = vpop.f32.mrb[0].mxu0
  %v1852 = vadd.f32 %v1079, %v1851
  %v1853 = vpop.f32.mrb[0].mxu0
  %1854 = vmatprep.mubr.f32.mxu0 0.0
  %1855 = vmatmul.mubr.f32.gmra.mrb[0].mxu0 %v1335
  %v1856 = vpop.f32.mrb[0].mxu0
  %v1857 = vadd.f32 %v1079, %v1856
  %v1858 = vpop.f32.mrb[0].mxu0
  %1859 = vmatprep.mubr.f32.mxu0 0.0
  %1860 = vmatmul.mubr.f32.gmra.mrb[0].mxu0 %v1338
  %v1861 = vpop.f32.mrb[0].mxu0
  %v1862 = vadd.f32 %v1079, %v1861
  %v1863 = vpop.f32.mrb[0].mxu0
  %1864 = vmatprep.mubr.f32.mxu0 0.0
  %1865 = vmatmul.mubr.f32.gmra.mrb[0].mxu0 %v1341
  %v1866 = vpop.f32.mrb[0].mxu0
  %v1867 = vadd.f32 %v1079, %v1866
  %v1868 = vpop.f32.mrb[0].mxu0
  %1869 = vmatprep.mubr.f32.mxu0 0.0
  %1870 = vmatmul.mubr.f32.gmra.mrb[0].mxu0 %v1344
  %v1871 = vpop.f32.mrb[0].mxu0
  %v1872 = vadd.f32 %v1079, %v1871
  %v1873 = vpop.f32.mrb[0].mxu0
  %1874 = vmatprep.mubr.f32.mxu0 0.0
  %1875 = vmatmul.mubr.f32.gmra.mrb[0].mxu0 %v1347
  %v1876 = vpop.f32.mrb[0].mxu0
  %v1877 = vadd.f32 %v1079, %v1876
  %v1878 = vpop.f32.mrb[0].mxu0
  %1879 = vmatprep.mubr.f32.mxu0 0.0
  %1880 = vmatmul.mubr.f32.gmra.mrb[0].mxu0 %v1350
  %v1881 = vpop.f32.mrb[0].mxu0
  %v1882 = vadd.f32 %v1079, %v1881
  %v1883 = vpop.f32.mrb[0].mxu0
  %1884 = vmatprep.mubr.f32.mxu0 0.0
  %1885 = vmatmul.mubr.f32.gmra.mrb[0].mxu0 %v1353
  %v1886 = vpop.f32.mrb[0].mxu0
  %v1887 = vadd.f32 %v1079, %v1886
  %v1888 = vpop.f32.mrb[0].mxu0
  %1889 = vmatprep.mubr.f32.mxu0 0.0
  %1890 = vmatmul.mubr.f32.gmra.mrb[0].mxu0 %v1356
  %v1891 = vpop.f32.mrb[0].mxu0
  %v1892 = vadd.f32 %v1079, %v1891
  %v1893 = vpop.f32.mrb[0].mxu0
  %1894 = vmatprep.mubr.f32.mxu0 0.0
  %1895 = vmatmul.mubr.f32.gmra.mrb[0].mxu0 %v1359
  %v1896 = vpop.f32.mrb[0].mxu0
  %v1897 = vadd.f32 %v1079, %v1896
  %v1898 = vpop.f32.mrb[0].mxu0
  %1899 = vmatprep.mubr.f32.mxu0 0.0
  %1900 = vmatmul.mubr.f32.gmra.mrb[0].mxu0 %v1362
  %v1901 = vpop.f32.mrb[0].mxu0
  %v1902 = vadd.f32 %v1079, %v1901
  %v1903 = vpop.f32.mrb[0].mxu0
  %1904 = vmatprep.mubr.f32.mxu0 0.0
  %1905 = vmatmul.mubr.f32.gmra.mrb[0].mxu0 %v1365
  %v1906 = vpop.f32.mrb[0].mxu0
  %v1907 = vadd.f32 %v1079, %v1906
  %v1908 = vpop.f32.mrb[0].mxu0
  %1909 = vmatprep.mubr.f32.mxu0 0.0
  %1910 = vmatmul.mubr.f32.gmra.mrb[0].mxu0 %v1368
  %v1911 = vpop.f32.mrb[0].mxu0
  %v1912 = vadd.f32 %v1079, %v1911
  %v1913 = vpop.f32.mrb[0].mxu0
  %1914 = vdwg.mxu0
  %v1915 = vmax.f32 %v1437, 0.0
  %v1916 = vmax.f32 %v1442, 0.0
  %v1917 = vmax.f32 %v1447, 0.0
  %v1918 = vmax.f32 %v1452, 0.0
  %v1919 = vmax.f32 %v1457, 0.0
  %v1920 = vmax.f32 %v1462, 0.0
  %v1921 = vmax.f32 %v1467, 0.0
  %v1922 = vmax.f32 %v1472, 0.0
  %v1923 = vmax.f32 %v1477, 0.0
  %v1924 = vmax.f32 %v1482, 0.0
  %v1925 = vmax.f32 %v1487, 0.0
  %v1926 = vmax.f32 %v1492, 0.0
  %v1927 = vmax.f32 %v1497, 0.0
  %v1928 = vmax.f32 %v1502, 0.0
  %v1929 = vmax.f32 %v1507, 0.0
  %v1930 = vmax.f32 %v1512, 0.0
  %v1931 = vmax.f32 %v1517, 0.0
  %v1932 = vmax.f32 %v1522, 0.0
  %v1933 = vmax.f32 %v1527, 0.0
  %v1934 = vmax.f32 %v1532, 0.0
  %v1935 = vmax.f32 %v1537, 0.0
  %v1936 = vmax.f32 %v1542, 0.0
  %v1937 = vmax.f32 %v1547, 0.0
  %v1938 = vmax.f32 %v1552, 0.0
  %v1939 = vmax.f32 %v1557, 0.0
  %v1940 = vmax.f32 %v1562, 0.0
  %v1941 = vmax.f32 %v1567, 0.0
  %v1942 = vmax.f32 %v1572, 0.0
  %v1943 = vmax.f32 %v1577, 0.0
  %v1944 = vmax.f32 %v1582, 0.0
  %v1945 = vmax.f32 %v1587, 0.0
  %v1946 = vmax.f32 %v1592, 0.0
  %v1947 = vmax.f32 %v1597, 0.0
  %v1948 = vmax.f32 %v1602, 0.0
  %v1949 = vmax.f32 %v1607, 0.0
  %v1950 = vmax.f32 %v1612, 0.0
  %v1951 = vmax.f32 %v1617, 0.0
  %v1952 = vmax.f32 %v1622, 0.0
  %v1953 = vmax.f32 %v1627, 0.0
  %v1954 = vmax.f32 %v1632, 0.0
  %v1955 = vmax.f32 %v1637, 0.0
  %v1956 = vmax.f32 %v1642, 0.0
  %v1957 = vmax.f32 %v1647, 0.0
  %v1958 = vmax.f32 %v1652, 0.0
  %v1959 = vmax.f32 %v1657, 0.0
  %v1960 = vmax.f32 %v1662, 0.0
  %v1961 = vmax.f32 %v1667, 0.0
  %v1962 = vmax.f32 %v1672, 0.0
  %v1963 = vmax.f32 %v1677, 0.0
  %v1964 = vmax.f32 %v1682, 0.0
  %v1965 = vmax.f32 %v1687, 0.0
  %v1966 = vmax.f32 %v1692, 0.0
  %v1967 = vmax.f32 %v1697, 0.0
  %v1968 = vmax.f32 %v1702, 0.0
  %v1969 = vmax.f32 %v1707, 0.0
  %v1970 = vmax.f32 %v1712, 0.0
  %v1971 = vmax.f32 %v1717, 0.0
  %v1972 = vmax.f32 %v1722, 0.0
  %v1973 = vmax.f32 %v1727, 0.0
  %v1974 = vmax.f32 %v1732, 0.0
  %v1975 = vmax.f32 %v1737, 0.0
  %v1976 = vmax.f32 %v1742, 0.0
  %v1977 = vmax.f32 %v1747, 0.0
  %v1978 = vmax.f32 %v1752, 0.0
  %v1979 = vmax.f32 %v1757, 0.0
  %v1980 = vmax.f32 %v1762, 0.0
  %v1981 = vmax.f32 %v1767, 0.0
  %v1982 = vmax.f32 %v1772, 0.0
  %v1983 = vmax.f32 %v1777, 0.0
  %v1984 = vmax.f32 %v1782, 0.0
  %v1985 = vmax.f32 %v1787, 0.0
  %v1986 = vmax.f32 %v1792, 0.0
  %v1987 = vmax.f32 %v1797, 0.0
  %v1988 = vmax.f32 %v1802, 0.0
  %v1989 = vmax.f32 %v1807, 0.0
  %v1990 = vmax.f32 %v1812, 0.0
  %v1991 = vmax.f32 %v1817, 0.0
  %v1992 = vmax.f32 %v1822, 0.0
  %v1993 = vmax.f32 %v1827, 0.0
  %v1994 = vmax.f32 %v1832, 0.0
  %v1995 = vmax.f32 %v1837, 0.0
  %v1996 = vmax.f32 %v1842, 0.0
  %v1997 = vmax.f32 %v1847, 0.0
  %v1998 = vmax.f32 %v1852, 0.0
  %v1999 = vmax.f32 %v1857, 0.0
  %v2000 = vmax.f32 %v1862, 0.0
  %v2001 = vmax.f32 %v1867, 0.0
  %v2002 = vmax.f32 %v1872, 0.0
  %v2003 = vmax.f32 %v1877, 0.0
  %v2004 = vmax.f32 %v1882, 0.0
  %v2005 = vmax.f32 %v1887, 0.0
  %v2006 = vmax.f32 %v1892, 0.0
  %v2007 = vmax.f32 %v1897, 0.0
  %v2008 = vmax.f32 %v1902, 0.0
  %v2009 = vmax.f32 %v1907, 0.0
  %v2010 = vmax.f32 %v1912, 0.0
  %v2011 = vld [vmem:[%s5] sm:$0x1]
  %v2013 = vlaneseq
  %v2014 = vshrl.u32 %v2013, 7
  %v2015 = vsub.s32 0, %v2014
  %v2016 = vrot.slane %v2011, %v2015
  %v2018 = vmul.f32 %v1915, %v2016
  %v2019 = vmul.f32 %v1916, %v2016
  %v2020 = vmul.f32 %v1917, %v2016
  %v2021 = vmul.f32 %v1918, %v2016
  %v2022 = vmul.f32 %v1919, %v2016
  %v2023 = vmul.f32 %v1920, %v2016
  %v2024 = vmul.f32 %v1921, %v2016
  %v2025 = vmul.f32 %v1922, %v2016
  %v2026 = vmul.f32 %v1923, %v2016
  %v2027 = vmul.f32 %v1924, %v2016
  %v2028 = vmul.f32 %v1925, %v2016
  %v2029 = vmul.f32 %v1926, %v2016
  %v2030 = vmul.f32 %v1927, %v2016
  %v2031 = vmul.f32 %v1928, %v2016
  %v2032 = vmul.f32 %v1929, %v2016
  %v2033 = vmul.f32 %v1930, %v2016
  %v2034 = vmul.f32 %v1931, %v2016
  %v2035 = vmul.f32 %v1932, %v2016
  %v2036 = vmul.f32 %v1933, %v2016
  %v2037 = vmul.f32 %v1934, %v2016
  %v2038 = vmul.f32 %v1935, %v2016
  %v2039 = vmul.f32 %v1936, %v2016
  %v2040 = vmul.f32 %v1937, %v2016
  %v2041 = vmul.f32 %v1938, %v2016
  %v2042 = vmul.f32 %v1939, %v2016
  %v2043 = vmul.f32 %v1940, %v2016
  %v2044 = vmul.f32 %v1941, %v2016
  %v2045 = vmul.f32 %v1942, %v2016
  %v2046 = vmul.f32 %v1943, %v2016
  %v2047 = vmul.f32 %v1944, %v2016
  %v2048 = vmul.f32 %v1945, %v2016
  %v2049 = vmul.f32 %v1946, %v2016
  %v2050 = vmul.f32 %v1947, %v2016
  %v2051 = vmul.f32 %v1948, %v2016
  %v2052 = vmul.f32 %v1949, %v2016
  %v2053 = vmul.f32 %v1950, %v2016
  %v2054 = vmul.f32 %v1951, %v2016
  %v2055 = vmul.f32 %v1952, %v2016
  %v2056 = vmul.f32 %v1953, %v2016
  %v2057 = vmul.f32 %v1954, %v2016
  %v2058 = vmul.f32 %v1955, %v2016
  %v2059 = vmul.f32 %v1956, %v2016
  %v2060 = vmul.f32 %v1957, %v2016
  %v2061 = vmul.f32 %v1958, %v2016
  %v2062 = vmul.f32 %v1959, %v2016
  %v2063 = vmul.f32 %v1960, %v2016
  %v2064 = vmul.f32 %v1961, %v2016
  %v2065 = vmul.f32 %v1962, %v2016
  %v2066 = vmul.f32 %v1963, %v2016
  %v2067 = vmul.f32 %v1964, %v2016
  %v2068 = vmul.f32 %v1965, %v2016
  %v2069 = vmul.f32 %v1966, %v2016
  %v2070 = vmul.f32 %v1967, %v2016
  %v2071 = vmul.f32 %v1968, %v2016
  %v2072 = vmul.f32 %v1969, %v2016
  %v2073 = vmul.f32 %v1970, %v2016
  %v2074 = vmul.f32 %v1971, %v2016
  %v2075 = vmul.f32 %v1972, %v2016
  %v2076 = vmul.f32 %v1973, %v2016
  %v2077 = vmul.f32 %v1974, %v2016
  %v2078 = vmul.f32 %v1975, %v2016
  %v2079 = vmul.f32 %v1976, %v2016
  %v2080 = vmul.f32 %v1977, %v2016
  %v2081 = vmul.f32 %v1978, %v2016
  %v2082 = vmul.f32 %v1979, %v2016
  %v2083 = vmul.f32 %v1980, %v2016
  %v2084 = vmul.f32 %v1981, %v2016
  %v2085 = vmul.f32 %v1982, %v2016
  %v2086 = vmul.f32 %v1983, %v2016
  %v2087 = vmul.f32 %v1984, %v2016
  %v2088 = vmul.f32 %v1985, %v2016
  %v2089 = vmul.f32 %v1986, %v2016
  %v2090 = vmul.f32 %v1987, %v2016
  %v2091 = vmul.f32 %v1988, %v2016
  %v2092 = vmul.f32 %v1989, %v2016
  %v2093 = vmul.f32 %v1990, %v2016
  %v2094 = vmul.f32 %v1991, %v2016
  %v2095 = vmul.f32 %v1992, %v2016
  %v2096 = vmul.f32 %v1993, %v2016
  %v2097 = vmul.f32 %v1994, %v2016
  %v2098 = vmul.f32 %v1995, %v2016
  %v2099 = vmul.f32 %v1996, %v2016
  %v2100 = vmul.f32 %v1997, %v2016
  %v2101 = vmul.f32 %v1998, %v2016
  %v2102 = vmul.f32 %v1999, %v2016
  %v2103 = vmul.f32 %v2000, %v2016
  %v2104 = vmul.f32 %v2001, %v2016
  %v2105 = vmul.f32 %v2002, %v2016
  %v2106 = vmul.f32 %v2003, %v2016
  %v2107 = vmul.f32 %v2004, %v2016
  %v2108 = vmul.f32 %v2005, %v2016
  %v2109 = vmul.f32 %v2006, %v2016
  %v2110 = vmul.f32 %v2007, %v2016
  %v2111 = vmul.f32 %v2008, %v2016
  %v2112 = vmul.f32 %v2009, %v2016
  %v2113 = vmul.f32 %v2010, %v2016
  %v2114 = vsel %vm1081, %v2018, 0.0
  %2115 = vadd.xlane.f32.xlu0 %v2114
  %v2116 = vpop.xlane.xlu0 %2115
  %v2117 = vsel %vm1081, %v2019, 0.0
  %2118 = vadd.xlane.f32.xlu0 %v2117
  %v2119 = vpop.xlane.xlu0 %2118
  %v2120 = vsel %vm1081, %v2020, 0.0
  %2121 = vadd.xlane.f32.xlu0 %v2120
  %v2122 = vpop.xlane.xlu0 %2121
  %v2123 = vsel %vm1081, %v2021, 0.0
  %2124 = vadd.xlane.f32.xlu0 %v2123
  %v2125 = vpop.xlane.xlu0 %2124
  %v2126 = vsel %vm1081, %v2022, 0.0
  %2127 = vadd.xlane.f32.xlu0 %v2126
  %v2128 = vpop.xlane.xlu0 %2127
  %v2129 = vsel %vm1081, %v2023, 0.0
  %2130 = vadd.xlane.f32.xlu0 %v2129
  %v2131 = vpop.xlane.xlu0 %2130
  %v2132 = vsel %vm1081, %v2024, 0.0
  %2133 = vadd.xlane.f32.xlu0 %v2132
  %v2134 = vpop.xlane.xlu0 %2133
  %v2135 = vsel %vm1081, %v2025, 0.0
  %2136 = vadd.xlane.f32.xlu0 %v2135
  %v2137 = vpop.xlane.xlu0 %2136
  %v2138 = vsel %vm1081, %v2026, 0.0
  %2139 = vadd.xlane.f32.xlu0 %v2138
  %v2140 = vpop.xlane.xlu0 %2139
  %v2141 = vsel %vm1081, %v2027, 0.0
  %2142 = vadd.xlane.f32.xlu0 %v2141
  %v2143 = vpop.xlane.xlu0 %2142
  %v2144 = vsel %vm1081, %v2028, 0.0
  %2145 = vadd.xlane.f32.xlu0 %v2144
  %v2146 = vpop.xlane.xlu0 %2145
  %v2147 = vsel %vm1081, %v2029, 0.0
  %2148 = vadd.xlane.f32.xlu0 %v2147
  %v2149 = vpop.xlane.xlu0 %2148
  %v2150 = vsel %vm1081, %v2030, 0.0
  %2151 = vadd.xlane.f32.xlu0 %v2150
  %v2152 = vpop.xlane.xlu0 %2151
  %v2153 = vsel %vm1081, %v2031, 0.0
  %2154 = vadd.xlane.f32.xlu0 %v2153
  %v2155 = vpop.xlane.xlu0 %2154
  %v2156 = vsel %vm1081, %v2032, 0.0
  %2157 = vadd.xlane.f32.xlu0 %v2156
  %v2158 = vpop.xlane.xlu0 %2157
  %v2159 = vsel %vm1081, %v2033, 0.0
  %2160 = vadd.xlane.f32.xlu0 %v2159
  %v2161 = vpop.xlane.xlu0 %2160
  %v2162 = vsel %vm1081, %v2034, 0.0
  %2163 = vadd.xlane.f32.xlu0 %v2162
  %v2164 = vpop.xlane.xlu0 %2163
  %v2165 = vsel %vm1081, %v2035, 0.0
  %2166 = vadd.xlane.f32.xlu0 %v2165
  %v2167 = vpop.xlane.xlu0 %2166
  %v2168 = vsel %vm1081, %v2036, 0.0
  %2169 = vadd.xlane.f32.xlu0 %v2168
  %v2170 = vpop.xlane.xlu0 %2169
  %v2171 = vsel %vm1081, %v2037, 0.0
  %2172 = vadd.xlane.f32.xlu0 %v2171
  %v2173 = vpop.xlane.xlu0 %2172
  %v2174 = vsel %vm1081, %v2038, 0.0
  %2175 = vadd.xlane.f32.xlu0 %v2174
  %v2176 = vpop.xlane.xlu0 %2175
  %v2177 = vsel %vm1081, %v2039, 0.0
  %2178 = vadd.xlane.f32.xlu0 %v2177
  %v2179 = vpop.xlane.xlu0 %2178
  %v2180 = vsel %vm1081, %v2040, 0.0
  %2181 = vadd.xlane.f32.xlu0 %v2180
  %v2182 = vpop.xlane.xlu0 %2181
  %v2183 = vsel %vm1081, %v2041, 0.0
  %2184 = vadd.xlane.f32.xlu0 %v2183
  %v2185 = vpop.xlane.xlu0 %2184
  %v2186 = vsel %vm1081, %v2042, 0.0
  %2187 = vadd.xlane.f32.xlu0 %v2186
  %v2188 = vpop.xlane.xlu0 %2187
  %v2189 = vsel %vm1081, %v2043, 0.0
  %2190 = vadd.xlane.f32.xlu0 %v2189
  %v2191 = vpop.xlane.xlu0 %2190
  %v2192 = vsel %vm1081, %v2044, 0.0
  %2193 = vadd.xlane.f32.xlu0 %v2192
  %v2194 = vpop.xlane.xlu0 %2193
  %v2195 = vsel %vm1081, %v2045, 0.0
  %2196 = vadd.xlane.f32.xlu0 %v2195
  %v2197 = vpop.xlane.xlu0 %2196
  %v2198 = vsel %vm1081, %v2046, 0.0
  %2199 = vadd.xlane.f32.xlu0 %v2198
  %v2200 = vpop.xlane.xlu0 %2199
  %v2201 = vsel %vm1081, %v2047, 0.0
  %2202 = vadd.xlane.f32.xlu0 %v2201
  %v2203 = vpop.xlane.xlu0 %2202
  %v2204 = vsel %vm1081, %v2048, 0.0
  %2205 = vadd.xlane.f32.xlu0 %v2204
  %v2206 = vpop.xlane.xlu0 %2205
  %v2207 = vsel %vm1081, %v2049, 0.0
  %2208 = vadd.xlane.f32.xlu0 %v2207
  %v2209 = vpop.xlane.xlu0 %2208
  %v2210 = vsel %vm1081, %v2050, 0.0
  %2211 = vadd.xlane.f32.xlu0 %v2210
  %v2212 = vpop.xlane.xlu0 %2211
  %v2213 = vsel %vm1081, %v2051, 0.0
  %2214 = vadd.xlane.f32.xlu0 %v2213
  %v2215 = vpop.xlane.xlu0 %2214
  %v2216 = vsel %vm1081, %v2052, 0.0
  %2217 = vadd.xlane.f32.xlu0 %v2216
  %v2218 = vpop.xlane.xlu0 %2217
  %v2219 = vsel %vm1081, %v2053, 0.0
  %2220 = vadd.xlane.f32.xlu0 %v2219
  %v2221 = vpop.xlane.xlu0 %2220
  %v2222 = vsel %vm1081, %v2054, 0.0
  %2223 = vadd.xlane.f32.xlu0 %v2222
  %v2224 = vpop.xlane.xlu0 %2223
  %v2225 = vsel %vm1081, %v2055, 0.0
  %2226 = vadd.xlane.f32.xlu0 %v2225
  %v2227 = vpop.xlane.xlu0 %2226
  %v2228 = vsel %vm1081, %v2056, 0.0
  %2229 = vadd.xlane.f32.xlu0 %v2228
  %v2230 = vpop.xlane.xlu0 %2229
  %v2231 = vsel %vm1081, %v2057, 0.0
  %2232 = vadd.xlane.f32.xlu0 %v2231
  %v2233 = vpop.xlane.xlu0 %2232
  %v2234 = vsel %vm1081, %v2058, 0.0
  %2235 = vadd.xlane.f32.xlu0 %v2234
  %v2236 = vpop.xlane.xlu0 %2235
  %v2237 = vsel %vm1081, %v2059, 0.0
  %2238 = vadd.xlane.f32.xlu0 %v2237
  %v2239 = vpop.xlane.xlu0 %2238
  %v2240 = vsel %vm1081, %v2060, 0.0
  %2241 = vadd.xlane.f32.xlu0 %v2240
  %v2242 = vpop.xlane.xlu0 %2241
  %v2243 = vsel %vm1081, %v2061, 0.0
  %2244 = vadd.xlane.f32.xlu0 %v2243
  %v2245 = vpop.xlane.xlu0 %2244
  %v2246 = vsel %vm1081, %v2062, 0.0
  %2247 = vadd.xlane.f32.xlu0 %v2246
  %v2248 = vpop.xlane.xlu0 %2247
  %v2249 = vsel %vm1081, %v2063, 0.0
  %2250 = vadd.xlane.f32.xlu0 %v2249
  %v2251 = vpop.xlane.xlu0 %2250
  %v2252 = vsel %vm1081, %v2064, 0.0
  %2253 = vadd.xlane.f32.xlu0 %v2252
  %v2254 = vpop.xlane.xlu0 %2253
  %v2255 = vsel %vm1081, %v2065, 0.0
  %2256 = vadd.xlane.f32.xlu0 %v2255
  %v2257 = vpop.xlane.xlu0 %2256
  %v2258 = vsel %vm1081, %v2066, 0.0
  %2259 = vadd.xlane.f32.xlu0 %v2258
  %v2260 = vpop.xlane.xlu0 %2259
  %v2261 = vsel %vm1081, %v2067, 0.0
  %2262 = vadd.xlane.f32.xlu0 %v2261
  %v2263 = vpop.xlane.xlu0 %2262
  %v2264 = vsel %vm1081, %v2068, 0.0
  %2265 = vadd.xlane.f32.xlu0 %v2264
  %v2266 = vpop.xlane.xlu0 %2265
  %v2267 = vsel %vm1081, %v2069, 0.0
  %2268 = vadd.xlane.f32.xlu0 %v2267
  %v2269 = vpop.xlane.xlu0 %2268
  %v2270 = vsel %vm1081, %v2070, 0.0
  %2271 = vadd.xlane.f32.xlu0 %v2270
  %v2272 = vpop.xlane.xlu0 %2271
  %v2273 = vsel %vm1081, %v2071, 0.0
  %2274 = vadd.xlane.f32.xlu0 %v2273
  %v2275 = vpop.xlane.xlu0 %2274
  %v2276 = vsel %vm1081, %v2072, 0.0
  %2277 = vadd.xlane.f32.xlu0 %v2276
  %v2278 = vpop.xlane.xlu0 %2277
  %v2279 = vsel %vm1081, %v2073, 0.0
  %2280 = vadd.xlane.f32.xlu0 %v2279
  %v2281 = vpop.xlane.xlu0 %2280
  %v2282 = vsel %vm1081, %v2074, 0.0
  %2283 = vadd.xlane.f32.xlu0 %v2282
  %v2284 = vpop.xlane.xlu0 %2283
  %v2285 = vsel %vm1081, %v2075, 0.0
  %2286 = vadd.xlane.f32.xlu0 %v2285
  %v2287 = vpop.xlane.xlu0 %2286
  %v2288 = vsel %vm1081, %v2076, 0.0
  %2289 = vadd.xlane.f32.xlu0 %v2288
  %v2290 = vpop.xlane.xlu0 %2289
  %v2291 = vsel %vm1081, %v2077, 0.0
  %2292 = vadd.xlane.f32.xlu0 %v2291
  %v2293 = vpop.xlane.xlu0 %2292
  %v2294 = vsel %vm1081, %v2078, 0.0
  %2295 = vadd.xlane.f32.xlu0 %v2294
  %v2296 = vpop.xlane.xlu0 %2295
  %v2297 = vsel %vm1081, %v2079, 0.0
  %2298 = vadd.xlane.f32.xlu0 %v2297
  %v2299 = vpop.xlane.xlu0 %2298
  %v2300 = vsel %vm1081, %v2080, 0.0
  %2301 = vadd.xlane.f32.xlu0 %v2300
  %v2302 = vpop.xlane.xlu0 %2301
  %v2303 = vsel %vm1081, %v2081, 0.0
  %2304 = vadd.xlane.f32.xlu0 %v2303
  %v2305 = vpop.xlane.xlu0 %2304
  %v2306 = vsel %vm1081, %v2082, 0.0
  %2307 = vadd.xlane.f32.xlu0 %v2306
  %v2308 = vpop.xlane.xlu0 %2307
  %v2309 = vsel %vm1081, %v2083, 0.0
  %2310 = vadd.xlane.f32.xlu0 %v2309
  %v2311 = vpop.xlane.xlu0 %2310
  %v2312 = vsel %vm1081, %v2084, 0.0
  %2313 = vadd.xlane.f32.xlu0 %v2312
  %v2314 = vpop.xlane.xlu0 %2313
  %v2315 = vsel %vm1081, %v2085, 0.0
  %2316 = vadd.xlane.f32.xlu0 %v2315
  %v2317 = vpop.xlane.xlu0 %2316
  %v2318 = vsel %vm1081, %v2086, 0.0
  %2319 = vadd.xlane.f32.xlu0 %v2318
  %v2320 = vpop.xlane.xlu0 %2319
  %v2321 = vsel %vm1081, %v2087, 0.0
  %2322 = vadd.xlane.f32.xlu0 %v2321
  %v2323 = vpop.xlane.xlu0 %2322
  %v2324 = vsel %vm1081, %v2088, 0.0
  %2325 = vadd.xlane.f32.xlu0 %v2324
  %v2326 = vpop.xlane.xlu0 %2325
  %v2327 = vsel %vm1081, %v2089, 0.0
  %2328 = vadd.xlane.f32.xlu0 %v2327
  %v2329 = vpop.xlane.xlu0 %2328
  %v2330 = vsel %vm1081, %v2090, 0.0
  %2331 = vadd.xlane.f32.xlu0 %v2330
  %v2332 = vpop.xlane.xlu0 %2331
  %v2333 = vsel %vm1081, %v2091, 0.0
  %2334 = vadd.xlane.f32.xlu0 %v2333
  %v2335 = vpop.xlane.xlu0 %2334
  %v2336 = vsel %vm1081, %v2092, 0.0
  %2337 = vadd.xlane.f32.xlu0 %v2336
  %v2338 = vpop.xlane.xlu0 %2337
  %v2339 = vsel %vm1081, %v2093, 0.0
  %2340 = vadd.xlane.f32.xlu0 %v2339
  %v2341 = vpop.xlane.xlu0 %2340
  %v2342 = vsel %vm1081, %v2094, 0.0
  %2343 = vadd.xlane.f32.xlu0 %v2342
  %v2344 = vpop.xlane.xlu0 %2343
  %v2345 = vsel %vm1081, %v2095, 0.0
  %2346 = vadd.xlane.f32.xlu0 %v2345
  %v2347 = vpop.xlane.xlu0 %2346
  %v2348 = vsel %vm1081, %v2096, 0.0
  %2349 = vadd.xlane.f32.xlu0 %v2348
  %v2350 = vpop.xlane.xlu0 %2349
  %v2351 = vsel %vm1081, %v2097, 0.0
  %2352 = vadd.xlane.f32.xlu0 %v2351
  %v2353 = vpop.xlane.xlu0 %2352
  %v2354 = vsel %vm1081, %v2098, 0.0
  %2355 = vadd.xlane.f32.xlu0 %v2354
  %v2356 = vpop.xlane.xlu0 %2355
  %v2357 = vsel %vm1081, %v2099, 0.0
  %2358 = vadd.xlane.f32.xlu0 %v2357
  %v2359 = vpop.xlane.xlu0 %2358
  %v2360 = vsel %vm1081, %v2100, 0.0
  %2361 = vadd.xlane.f32.xlu0 %v2360
  %v2362 = vpop.xlane.xlu0 %2361
  %v2363 = vsel %vm1081, %v2101, 0.0
  %2364 = vadd.xlane.f32.xlu0 %v2363
  %v2365 = vpop.xlane.xlu0 %2364
  %v2366 = vsel %vm1081, %v2102, 0.0
  %2367 = vadd.xlane.f32.xlu0 %v2366
  %v2368 = vpop.xlane.xlu0 %2367
  %v2369 = vsel %vm1081, %v2103, 0.0
  %2370 = vadd.xlane.f32.xlu0 %v2369
  %v2371 = vpop.xlane.xlu0 %2370
  %v2372 = vsel %vm1081, %v2104, 0.0
  %2373 = vadd.xlane.f32.xlu0 %v2372
  %v2374 = vpop.xlane.xlu0 %2373
  %v2375 = vsel %vm1081, %v2105, 0.0
  %2376 = vadd.xlane.f32.xlu0 %v2375
  %v2377 = vpop.xlane.xlu0 %2376
  %v2378 = vsel %vm1081, %v2106, 0.0
  %2379 = vadd.xlane.f32.xlu0 %v2378
  %v2380 = vpop.xlane.xlu0 %2379
  %v2381 = vsel %vm1081, %v2107, 0.0
  %2382 = vadd.xlane.f32.xlu0 %v2381
  %v2383 = vpop.xlane.xlu0 %2382
  %v2384 = vsel %vm1081, %v2108, 0.0
  %2385 = vadd.xlane.f32.xlu0 %v2384
  %v2386 = vpop.xlane.xlu0 %2385
  %v2387 = vsel %vm1081, %v2109, 0.0
  %2388 = vadd.xlane.f32.xlu0 %v2387
  %v2389 = vpop.xlane.xlu0 %2388
  %v2390 = vsel %vm1081, %v2110, 0.0
  %2391 = vadd.xlane.f32.xlu0 %v2390
  %v2392 = vpop.xlane.xlu0 %2391
  %v2393 = vsel %vm1081, %v2111, 0.0
  %2394 = vadd.xlane.f32.xlu0 %v2393
  %v2395 = vpop.xlane.xlu0 %2394
  %v2396 = vsel %vm1081, %v2112, 0.0
  %2397 = vadd.xlane.f32.xlu0 %v2396
  %v2398 = vpop.xlane.xlu0 %2397
  %v2399 = vsel %vm1081, %v2113, 0.0
  %2400 = vadd.xlane.f32.xlu0 %v2399
  %v2401 = vpop.xlane.xlu0 %2400
  %v2402 = vld [vmem:[#allocation2] sm:$0x1]
  %v2404 = vlaneseq
  %v2405 = vshrl.u32 %v2404, 7
  %v2406 = vsub.s32 0, %v2405
  %v2407 = vrot.slane %v2402, %v2406
  %v2409 = vadd.f32 %v2116, %v2407
  %v2410 = vadd.f32 %v2119, %v2407
  %v2411 = vadd.f32 %v2122, %v2407
  %v2412 = vadd.f32 %v2125, %v2407
  %v2413 = vadd.f32 %v2128, %v2407
  %v2414 = vadd.f32 %v2131, %v2407
  %v2415 = vadd.f32 %v2134, %v2407
  %v2416 = vadd.f32 %v2137, %v2407
  %v2417 = vadd.f32 %v2140, %v2407
  %v2418 = vadd.f32 %v2143, %v2407
  %v2419 = vadd.f32 %v2146, %v2407
  %v2420 = vadd.f32 %v2149, %v2407
  %v2421 = vadd.f32 %v2152, %v2407
  %v2422 = vadd.f32 %v2155, %v2407
  %v2423 = vadd.f32 %v2158, %v2407
  %v2424 = vadd.f32 %v2161, %v2407
  %v2425 = vadd.f32 %v2164, %v2407
  %v2426 = vadd.f32 %v2167, %v2407
  %v2427 = vadd.f32 %v2170, %v2407
  %v2428 = vadd.f32 %v2173, %v2407
  %v2429 = vadd.f32 %v2176, %v2407
  %v2430 = vadd.f32 %v2179, %v2407
  %v2431 = vadd.f32 %v2182, %v2407
  %v2432 = vadd.f32 %v2185, %v2407
  %v2433 = vadd.f32 %v2188, %v2407
  %v2434 = vadd.f32 %v2191, %v2407
  %v2435 = vadd.f32 %v2194, %v2407
  %v2436 = vadd.f32 %v2197, %v2407
  %v2437 = vadd.f32 %v2200, %v2407
  %v2438 = vadd.f32 %v2203, %v2407
  %v2439 = vadd.f32 %v2206, %v2407
  %v2440 = vadd.f32 %v2209, %v2407
  %v2441 = vadd.f32 %v2212, %v2407
  %v2442 = vadd.f32 %v2215, %v2407
  %v2443 = vadd.f32 %v2218, %v2407
  %v2444 = vadd.f32 %v2221, %v2407
  %v2445 = vadd.f32 %v2224, %v2407
  %v2446 = vadd.f32 %v2227, %v2407
  %v2447 = vadd.f32 %v2230, %v2407
  %v2448 = vadd.f32 %v2233, %v2407
  %v2449 = vadd.f32 %v2236, %v2407
  %v2450 = vadd.f32 %v2239, %v2407
  %v2451 = vadd.f32 %v2242, %v2407
  %v2452 = vadd.f32 %v2245, %v2407
  %v2453 = vadd.f32 %v2248, %v2407
  %v2454 = vadd.f32 %v2251, %v2407
  %v2455 = vadd.f32 %v2254, %v2407
  %v2456 = vadd.f32 %v2257, %v2407
  %v2457 = vadd.f32 %v2260, %v2407
  %v2458 = vadd.f32 %v2263, %v2407
  %v2459 = vadd.f32 %v2266, %v2407
  %v2460 = vadd.f32 %v2269, %v2407
  %v2461 = vadd.f32 %v2272, %v2407
  %v2462 = vadd.f32 %v2275, %v2407
  %v2463 = vadd.f32 %v2278, %v2407
  %v2464 = vadd.f32 %v2281, %v2407
  %v2465 = vadd.f32 %v2284, %v2407
  %v2466 = vadd.f32 %v2287, %v2407
  %v2467 = vadd.f32 %v2290, %v2407
  %v2468 = vadd.f32 %v2293, %v2407
  %v2469 = vadd.f32 %v2296, %v2407
  %v2470 = vadd.f32 %v2299, %v2407
  %v2471 = vadd.f32 %v2302, %v2407
  %v2472 = vadd.f32 %v2305, %v2407
  %v2473 = vadd.f32 %v2308, %v2407
  %v2474 = vadd.f32 %v2311, %v2407
  %v2475 = vadd.f32 %v2314, %v2407
  %v2476 = vadd.f32 %v2317, %v2407
  %v2477 = vadd.f32 %v2320, %v2407
  %v2478 = vadd.f32 %v2323, %v2407
  %v2479 = vadd.f32 %v2326, %v2407
  %v2480 = vadd.f32 %v2329, %v2407
  %v2481 = vadd.f32 %v2332, %v2407
  %v2482 = vadd.f32 %v2335, %v2407
  %v2483 = vadd.f32 %v2338, %v2407
  %v2484 = vadd.f32 %v2341, %v2407
  %v2485 = vadd.f32 %v2344, %v2407
  %v2486 = vadd.f32 %v2347, %v2407
  %v2487 = vadd.f32 %v2350, %v2407
  %v2488 = vadd.f32 %v2353, %v2407
  %v2489 = vadd.f32 %v2356, %v2407
  %v2490 = vadd.f32 %v2359, %v2407
  %v2491 = vadd.f32 %v2362, %v2407
  %v2492 = vadd.f32 %v2365, %v2407
  %v2493 = vadd.f32 %v2368, %v2407
  %v2494 = vadd.f32 %v2371, %v2407
  %v2495 = vadd.f32 %v2374, %v2407
  %v2496 = vadd.f32 %v2377, %v2407
  %v2497 = vadd.f32 %v2380, %v2407
  %v2498 = vadd.f32 %v2383, %v2407
  %v2499 = vadd.f32 %v2386, %v2407
  %v2500 = vadd.f32 %v2389, %v2407
  %v2501 = vadd.f32 %v2392, %v2407
  %v2502 = vadd.f32 %v2395, %v2407
  %v2503 = vadd.f32 %v2398, %v2407
  %v2504 = vadd.f32 %v2401, %v2407
  %vm2505 = vcmask 7168
  %2506 = vst.msk [vmem:[%s7] sm:$0xff] %vm2505, %v2409
  %2507 = vst.msk [vmem:[%s7 + $0x8] sm:$0xff] %vm2505, %v2410
  %2508 = vst.msk [vmem:[%s7 + $0x10] sm:$0xff] %vm2505, %v2411
  %2509 = vst.msk [vmem:[%s7 + $0x18] sm:$0xff] %vm2505, %v2412
  %2510 = vst.msk [vmem:[%s7 + $0x20] sm:$0xff] %vm2505, %v2413
  %2511 = vst.msk [vmem:[%s7 + $0x28] sm:$0xff] %vm2505, %v2414
  %2512 = vst.msk [vmem:[%s7 + $0x30] sm:$0xff] %vm2505, %v2415
  %2513 = vst.msk [vmem:[%s7 + $0x38] sm:$0xff] %vm2505, %v2416
  %2514 = vst.msk [vmem:[%s7 + $0x40] sm:$0xff] %vm2505, %v2417
  %2515 = vst.msk [vmem:[%s7 + $0x48] sm:$0xff] %vm2505, %v2418
  %2516 = vst.msk [vmem:[%s7 + $0x50] sm:$0xff] %vm2505, %v2419
  %2517 = vst.msk [vmem:[%s7 + $0x58] sm:$0xff] %vm2505, %v2420
  %2518 = vst.msk [vmem:[%s7 + $0x60] sm:$0xff] %vm2505, %v2421
  %2519 = vst.msk [vmem:[%s7 + $0x68] sm:$0xff] %vm2505, %v2422
  %2520 = vst.msk [vmem:[%s7 + $0x70] sm:$0xff] %vm2505, %v2423
  %2521 = vst.msk [vmem:[%s7 + $0x78] sm:$0xff] %vm2505, %v2424
  %2522 = vst.msk [vmem:[%s7 + $0x80] sm:$0xff] %vm2505, %v2425
  %2523 = vst.msk [vmem:[%s7 + $0x88] sm:$0xff] %vm2505, %v2426
  %2524 = vst.msk [vmem:[%s7 + $0x90] sm:$0xff] %vm2505, %v2427
  %2525 = vst.msk [vmem:[%s7 + $0x98] sm:$0xff] %vm2505, %v2428
  %2526 = vst.msk [vmem:[%s7 + $0xa0] sm:$0xff] %vm2505, %v2429
  %2527 = vst.msk [vmem:[%s7 + $0xa8] sm:$0xff] %vm2505, %v2430
  %2528 = vst.msk [vmem:[%s7 + $0xb0] sm:$0xff] %vm2505, %v2431
  %2529 = vst.msk [vmem:[%s7 + $0xb8] sm:$0xff] %vm2505, %v2432
  %2530 = vst.msk [vmem:[%s7 + $0xc0] sm:$0xff] %vm2505, %v2433
  %2531 = vst.msk [vmem:[%s7 + $0xc8] sm:$0xff] %vm2505, %v2434
  %2532 = vst.msk [vmem:[%s7 + $0xd0] sm:$0xff] %vm2505, %v2435
  %2533 = vst.msk [vmem:[%s7 + $0xd8] sm:$0xff] %vm2505, %v2436
  %2534 = vst.msk [vmem:[%s7 + $0xe0] sm:$0xff] %vm2505, %v2437
  %2535 = vst.msk [vmem:[%s7 + $0xe8] sm:$0xff] %vm2505, %v2438
  %2536 = vst.msk [vmem:[%s7 + $0xf0] sm:$0xff] %vm2505, %v2439
  %2537 = vst.msk [vmem:[%s7 + $0xf8] sm:$0xff] %vm2505, %v2440
  %2538 = vst.msk [vmem:[%s7 + $0x100] sm:$0xff] %vm2505, %v2441
  %2539 = vst.msk [vmem:[%s7 + $0x108] sm:$0xff] %vm2505, %v2442
  %2540 = vst.msk [vmem:[%s7 + $0x110] sm:$0xff] %vm2505, %v2443
  %2541 = vst.msk [vmem:[%s7 + $0x118] sm:$0xff] %vm2505, %v2444
  %2542 = vst.msk [vmem:[%s7 + $0x120] sm:$0xff] %vm2505, %v2445
  %2543 = vst.msk [vmem:[%s7 + $0x128] sm:$0xff] %vm2505, %v2446
  %2544 = vst.msk [vmem:[%s7 + $0x130] sm:$0xff] %vm2505, %v2447
  %2545 = vst.msk [vmem:[%s7 + $0x138] sm:$0xff] %vm2505, %v2448
  %2546 = vst.msk [vmem:[%s7 + $0x140] sm:$0xff] %vm2505, %v2449
  %2547 = vst.msk [vmem:[%s7 + $0x148] sm:$0xff] %vm2505, %v2450
  %2548 = vst.msk [vmem:[%s7 + $0x150] sm:$0xff] %vm2505, %v2451
  %2549 = vst.msk [vmem:[%s7 + $0x158] sm:$0xff] %vm2505, %v2452
  %2550 = vst.msk [vmem:[%s7 + $0x160] sm:$0xff] %vm2505, %v2453
  %2551 = vst.msk [vmem:[%s7 + $0x168] sm:$0xff] %vm2505, %v2454
  %2552 = vst.msk [vmem:[%s7 + $0x170] sm:$0xff] %vm2505, %v2455
  %2553 = vst.msk [vmem:[%s7 + $0x178] sm:$0xff] %vm2505, %v2456
  %2554 = vst.msk [vmem:[%s7 + $0x180] sm:$0xff] %vm2505, %v2457
  %2555 = vst.msk [vmem:[%s7 + $0x188] sm:$0xff] %vm2505, %v2458
  %2556 = vst.msk [vmem:[%s7 + $0x190] sm:$0xff] %vm2505, %v2459
  %2557 = vst.msk [vmem:[%s7 + $0x198] sm:$0xff] %vm2505, %v2460
  %2558 = vst.msk [vmem:[%s7 + $0x1a0] sm:$0xff] %vm2505, %v2461
  %2559 = vst.msk [vmem:[%s7 + $0x1a8] sm:$0xff] %vm2505, %v2462
  %2560 = vst.msk [vmem:[%s7 + $0x1b0] sm:$0xff] %vm2505, %v2463
  %2561 = vst.msk [vmem:[%s7 + $0x1b8] sm:$0xff] %vm2505, %v2464
  %2562 = vst.msk [vmem:[%s7 + $0x1c0] sm:$0xff] %vm2505, %v2465
  %2563 = vst.msk [vmem:[%s7 + $0x1c8] sm:$0xff] %vm2505, %v2466
  %2564 = vst.msk [vmem:[%s7 + $0x1d0] sm:$0xff] %vm2505, %v2467
  %2565 = vst.msk [vmem:[%s7 + $0x1d8] sm:$0xff] %vm2505, %v2468
  %2566 = vst.msk [vmem:[%s7 + $0x1e0] sm:$0xff] %vm2505, %v2469
  %2567 = vst.msk [vmem:[%s7 + $0x1e8] sm:$0xff] %vm2505, %v2470
  %2568 = vst.msk [vmem:[%s7 + $0x1f0] sm:$0xff] %vm2505, %v2471
  %2569 = vst.msk [vmem:[%s7 + $0x1f8] sm:$0xff] %vm2505, %v2472
  %2570 = vst.msk [vmem:[%s7 + $0x200] sm:$0xff] %vm2505, %v2473
  %2571 = vst.msk [vmem:[%s7 + $0x208] sm:$0xff] %vm2505, %v2474
  %2572 = vst.msk [vmem:[%s7 + $0x210] sm:$0xff] %vm2505, %v2475
  %2573 = vst.msk [vmem:[%s7 + $0x218] sm:$0xff] %vm2505, %v2476
  %2574 = vst.msk [vmem:[%s7 + $0x220] sm:$0xff] %vm2505, %v2477
  %2575 = vst.msk [vmem:[%s7 + $0x228] sm:$0xff] %vm2505, %v2478
  %2576 = vst.msk [vmem:[%s7 + $0x230] sm:$0xff] %vm2505, %v2479
  %2577 = vst.msk [vmem:[%s7 + $0x238] sm:$0xff] %vm2505, %v2480
  %2578 = vst.msk [vmem:[%s7 + $0x240] sm:$0xff] %vm2505, %v2481
  %2579 = vst.msk [vmem:[%s7 + $0x248] sm:$0xff] %vm2505, %v2482
  %2580 = vst.msk [vmem:[%s7 + $0x250] sm:$0xff] %vm2505, %v2483
  %2581 = vst.msk [vmem:[%s7 + $0x258] sm:$0xff] %vm2505, %v2484
  %2582 = vst.msk [vmem:[%s7 + $0x260] sm:$0xff] %vm2505, %v2485
  %2583 = vst.msk [vmem:[%s7 + $0x268] sm:$0xff] %vm2505, %v2486
  %2584 = vst.msk [vmem:[%s7 + $0x270] sm:$0xff] %vm2505, %v2487
  %2585 = vst.msk [vmem:[%s7 + $0x278] sm:$0xff] %vm2505, %v2488
  %2586 = vst.msk [vmem:[%s7 + $0x280] sm:$0xff] %vm2505, %v2489
  %2587 = vst.msk [vmem:[%s7 + $0x288] sm:$0xff] %vm2505, %v2490
  %2588 = vst.msk [vmem:[%s7 + $0x290] sm:$0xff] %vm2505, %v2491
  %2589 = vst.msk [vmem:[%s7 + $0x298] sm:$0xff] %vm2505, %v2492
  %2590 = vst.msk [vmem:[%s7 + $0x2a0] sm:$0xff] %vm2505, %v2493
  %2591 = vst.msk [vmem:[%s7 + $0x2a8] sm:$0xff] %vm2505, %v2494
  %2592 = vst.msk [vmem:[%s7 + $0x2b0] sm:$0xff] %vm2505, %v2495
  %2593 = vst.msk [vmem:[%s7 + $0x2b8] sm:$0xff] %vm2505, %v2496
  %2594 = vst.msk [vmem:[%s7 + $0x2c0] sm:$0xff] %vm2505, %v2497
  %2595 = vst.msk [vmem:[%s7 + $0x2c8] sm:$0xff] %vm2505, %v2498
  %2596 = vst.msk [vmem:[%s7 + $0x2d0] sm:$0xff] %vm2505, %v2499
  %2597 = vst.msk [vmem:[%s7 + $0x2d8] sm:$0xff] %vm2505, %v2500
  %2598 = vst.msk [vmem:[%s7 + $0x2e0] sm:$0xff] %vm2505, %v2501
  %2599 = vst.msk [vmem:[%s7 + $0x2e8] sm:$0xff] %vm2505, %v2502
  %2600 = vst.msk [vmem:[%s7 + $0x2f0] sm:$0xff] %vm2505, %v2503
  %2601 = vst.msk [vmem:[%s7 + $0x2f8] sm:$0xff] %vm2505, %v2504
  // Predicated region
  $region30: #{narx_forward.1} parent=0 // pred_check
    _
  $region31: #{narx_forward.1} parent=0 // pred_check_branch
    %2603 = sbr.rel (0) target = $region33
  $region32: #{narx_forward.1} parent=0 // pred_region
    _
  $region33: #{narx_forward.1} parent=0 // pred_fallthru
    _
  // Predicated region
  $region34: #{narx_forward.1} parent=0 // pred_check
    _
  $region35: #{narx_forward.1} parent=0 // pred_check_branch
    %2605 = sbr.rel (0) target = $region37
  $region36: #{narx_forward.1} parent=0 // pred_region
    _
  $region37: #{narx_forward.1} parent=0 // pred_fallthru
    _

</llo_original>
